<compile_context>
chip_gen: v6e
topology: v6e:2x2x1
jax: 0.10.0
libtpu: 0.0.40
codegen_flags: <defaults>
</compile_context>

<pallas_src>
import functools
import math

import jax
import jax.numpy as jnp
from jax.experimental import pallas as pl
from jax.experimental.pallas import tpu as pltpu

_EPS = 1e-5


def _round8(n):
    return ((n + 7) // 8) * 8


def _wstack_layout(cin, d, h, num_layers):
    """Static row layout of the packed weight stack (all blocks 8-row aligned)."""
    lay = {}
    r = 0
    lay["tok"] = r
    r += _round8(3 * cin)                     # token-conv taps (3*Cin rows, cols 0:D)
    layers = []
    for _ in range(num_layers):
        pa = r
        r += d                                # [W_per | W_aper]   (D, 2D)
        gate = r
        r += 2 * d                            # [Wg_p ; Wg_a]      (2D, D)
        outp = r
        r += d                                # W_out              (D, D)
        ms = r
        r += d                                # W_ms (BN folded)   (D, D)
        layers.append((pa, gate, outp, ms))
    lay["layers"] = layers
    lay["p1"] = r
    r += d                                    # W_p1 (D, H)
    lay["p2"] = r
    r += _round8(h)                           # W_p2 (H, c_out)
    lay["rows"] = _round8(r)
    return lay


# -----------------------------------------------------------------------------
# Fused whole-model kernel (single invocation, batch folded into rows)
# -----------------------------------------------------------------------------
def _timesnet_pki_kernel(slab_ref, w_ref, v_ref, scal_ref, out_ref,
                         *, B, T, Cin, D, H, c_out, L, lay):
    f32 = jnp.float32
    M = B * T
    C3P = _round8(3 * Cin)

    slab = slab_ref[...]                       # (M, C3P + D)
    xe = slab[:, :C3P]                         # [x_prev | x | x_next | zero pad]
    pos = slab[:, C3P:C3P + D]                 # positional embedding (tiled per batch)

    # ---- per-batch instance norm over time (unbiased=False), as in torch code ----
    # Circular rolls preserve per-channel time stats, so one mu/var covers all 3 taps.
    xn_parts, mus, stds = [], [], []
    for b in range(B):
        xb = xe[b * T:(b + 1) * T, :]
        mu_b = jnp.mean(xb, axis=0, keepdims=True)
        dcb = xb - mu_b
        var_b = jnp.mean(dcb * dcb, axis=0, keepdims=True)
        xn_parts.append(dcb * jax.lax.rsqrt(var_b + _EPS))
        mus.append(mu_b[:, Cin:2 * Cin])                      # stats of the "current" tap
        stds.append(jnp.sqrt(var_b[:, Cin:2 * Cin] + _EPS))   # kept only for de-norm
    xn = jnp.concatenate(xn_parts, axis=0) if B > 1 else xn_parts[0]   # (M, C3P)

    def wblk(r0, nrows, ncols):
        return w_ref[r0:r0 + nrows, 0:ncols]

    V = v_ref[...]                             # (8L+3, 2D) packed bias/gamma/score rows

    def vrow(i, ncols):
        return V[i:i + 1, 0:ncols]             # (1, ncols)

    # ---- DataEmbedding: circular 3-tap token conv as ONE matmul + positional ----
    w_tok = wblk(lay["tok"], C3P, D)           # zero-padded rows beyond 3*Cin
    enc = jnp.dot(xn, w_tok, preferred_element_type=f32) + pos

    ms_acc = jnp.zeros((M, D), f32) if L > 1 else None   # multi-scale accumulator
    agg_logit = jnp.zeros((M, 1), f32)                    # anomaly-score accumulator

    for l in range(L):                          # static unroll over layers
        pa_r, gate_r, out_r, ms_r = lay["layers"][l]
        bv = 8 * l

        # TODO(synk): PeriodicBranch (FFT->2D->PKI->CAA) source not provided; Linear+GELU surrogate.
        # TODO(synk): EnhancedAperiodicBranch (MSTC/trend/local) source not provided; Linear+ReLU surrogate.
        pa_pre = (jnp.dot(enc, wblk(pa_r, D, 2 * D), preferred_element_type=f32)
                  + vrow(bv + 0, 2 * D))
        p = jax.nn.gelu(pa_pre[:, :D])
        a = jnp.maximum(pa_pre[:, D:2 * D], 0.0)
        pa = jnp.concatenate([p, a], axis=-1)   # (M, 2D)

        # TODO(synk): EnhancedAdaptiveFusion source not provided; concat-free sigmoid-gate surrogate.
        g = jax.nn.sigmoid(jnp.dot(pa, wblk(gate_r, 2 * D, D),
                                   preferred_element_type=f32) + vrow(bv + 1, D))

        # TODO(synk): AnomalyAwareFusion source not provided; VPU weighted-sum score surrogate.
        s_logit = jnp.sum(pa * vrow(bv + 2, 2 * D), axis=-1, keepdims=True) + scal_ref[l]
        score = jax.nn.sigmoid(s_logit)         # (M, 1)

        fused = g * p + (1.0 - g) * a
        feat = 0.5 * (fused + 0.5 * (p + a))

        # output_projection: Linear -> LayerNorm -> ReLU (Dropout = identity in eval)
        out = jnp.dot(feat, wblk(out_r, D, D), preferred_element_type=f32) + vrow(bv + 3, D)
        omu = jnp.mean(out, axis=-1, keepdims=True)
        ovar = jnp.mean(jnp.square(out - omu), axis=-1, keepdims=True)
        y = (out - omu) * jax.lax.rsqrt(ovar + _EPS) * vrow(bv + 4, D) + vrow(bv + 5, D)
        y = jnp.maximum(y, 0.0)

        # block residual + outer residual + per-layer LayerNorm:
        #   block_out = y + enc ; enc <- LN(block_out + enc) = LN(y + 2*enc)
        pre = y + 2.0 * enc
        nmu = jnp.mean(pre, axis=-1, keepdims=True)
        nvar = jnp.mean(jnp.square(pre - nmu), axis=-1, keepdims=True)
        enc = (pre - nmu) * jax.lax.rsqrt(nvar + _EPS) * vrow(bv + 6, D) + vrow(bv + 7, D)

        # multi-scale fusion: accumulate enc_l @ W_ms_l (concat never materialized)
        if L > 1:
            ms_acc = ms_acc + jnp.dot(enc, wblk(ms_r, D, D), preferred_element_type=f32)

        # anomaly score aggregation: accumulate w_asf[l] * score_l
        agg_logit = agg_logit + score * scal_ref[L + l]

    gv = 8 * L                                  # first global row in the V stack

    # ---- multi-scale fusion (1x1 conv over concatenated layer channels + BN + ReLU) ----
    if L > 1:
        fused_ms = jnp.maximum(ms_acc + vrow(gv + 0, D), 0.0)
        enc = 0.5 * (enc + fused_ms)

    # ---- projection head ----
    h = jnp.maximum(jnp.dot(enc, wblk(lay["p1"], D, H), preferred_element_type=f32)
                    + vrow(gv + 1, H), 0.0)
    dec = jnp.dot(h, wblk(lay["p2"], H, c_out), preferred_element_type=f32) + vrow(gv + 2, c_out)

    # ---- de-normalization (per batch, per channel) ----
    dec_parts = [dec[b * T:(b + 1) * T, :] * stds[b] + mus[b] for b in range(B)]
    dec = jnp.concatenate(dec_parts, axis=0) if B > 1 else dec_parts[0]

    # ---- anomaly score aggregation: Conv1d(L, 1, 1) + Sigmoid ----
    agg = jax.nn.sigmoid(agg_logit + scal_ref[2 * L])

    # ---- single lane-dense output slab: [dec | agg | zeros] ----
    pad = out_ref.shape[1] - (c_out + 1)
    out_ref[...] = jnp.concatenate([dec, agg, jnp.zeros((M, pad), f32)], axis=-1)


# -----------------------------------------------------------------------------
# Wrapper: one pallas_call for the whole model
# -----------------------------------------------------------------------------
def model_forward(x_enc, params, *, d_model, c_out, num_layers):
    B, T, enc_in = x_enc.shape
    assert c_out == enc_in, "de-normalization broadcast requires c_out == enc_in"
    D, H, L = d_model, d_model // 2, num_layers
    M = B * T
    C3P = _round8(3 * enc_in)
    OUT_W = 128                               # lane-dense output width (unmasked stores)

    lay = _wstack_layout(enc_in, D, H, L)

    x = x_enc.astype(jnp.float32)
    # 3-tap circular unfold of the tiny raw input (roll commutes with instance-norm)
    x_unfold = jnp.concatenate([jnp.roll(x, 1, axis=1), x, jnp.roll(x, -1, axis=1)], axis=-1)
    pad = jnp.zeros((B, T, C3P - 3 * enc_in), jnp.float32)
    pos = jnp.broadcast_to(params["pos"][:T][None], (B, T, D))
    slab = jnp.concatenate([x_unfold, pad, pos], axis=-1).reshape(M, C3P + D)

    out = pl.pallas_call(
        functools.partial(_timesnet_pki_kernel, B=B, T=T, Cin=enc_in, D=D, H=H,
                          c_out=c_out, L=L, lay=lay),
        in_specs=[
            pl.BlockSpec(memory_space=pltpu.MemorySpace.VMEM),   # row-data slab
            pl.BlockSpec(memory_space=pltpu.MemorySpace.VMEM),   # packed weight stack
            pl.BlockSpec(memory_space=pltpu.MemorySpace.VMEM),   # packed vector stack
            pl.BlockSpec(memory_space=pltpu.MemorySpace.SMEM),   # true scalars
        ],
        out_specs=pl.BlockSpec(memory_space=pltpu.MemorySpace.VMEM),
        out_shape=jax.ShapeDtypeStruct((M, OUT_W), jnp.float32),
    )(slab, params["w_stack"], params["v_stack"], params["scalars"])

    dec = out[:, :c_out].reshape(B, T, c_out)
    agg = out[:, c_out:c_out + 1].reshape(B, T, 1)
    return dec, agg


# -----------------------------------------------------------------------------
# Parameter construction (deterministic surrogate weights, packed layouts)
# -----------------------------------------------------------------------------
def _glorot(key, shape):
    fan_in, fan_out = shape[0], shape[-1]
    lim = math.sqrt(6.0 / (fan_in + fan_out))
    return jax.random.uniform(key, shape, jnp.float32, -lim, lim)


def _positional_embedding(d_model, max_len):
    position = jnp.arange(max_len, dtype=jnp.float32)[:, None]
    div_term = jnp.exp(jnp.arange(0, d_model, 2, dtype=jnp.float32)
                       * -(math.log(10000.0) / d_model))
    pe = jnp.zeros((max_len, d_model), jnp.float32)
    pe = pe.at[:, 0::2].set(jnp.sin(position * div_term))
    pe = pe.at[:, 1::2].set(jnp.cos(position * div_term))
    return pe


def make_params(key, *, enc_in, d_model, e_layers, c_out, seq_len):
    D, H, L, Cin = d_model, d_model // 2, e_layers, enc_in
    lay = _wstack_layout(Cin, D, H, L)
    keys = iter(jax.random.split(key, 6 * L + 8))

    p = {"pos": _positional_embedding(D, seq_len)}

    # ---- packed weight stack ----
    W = jnp.zeros((lay["rows"], 2 * D), jnp.float32)
    w_tok = _glorot(next(keys), (3 * Cin, D))                 # circular Conv1d(enc_in,D,3), no bias
    W = W.at[lay["tok"]:lay["tok"] + 3 * Cin, :D].set(w_tok)

    bn_scale = 1.0 / math.sqrt(1.0 + 1e-5)                    # BatchNorm1d eval, default stats

    zero2 = jnp.zeros((2 * D,), jnp.float32)
    one_d = jnp.concatenate([jnp.ones((D,), jnp.float32), jnp.zeros((D,), jnp.float32)])
    vrows = []
    for l in range(L):
        pa_r, gate_r, out_r, ms_r = lay["layers"][l]
        W_per = _glorot(next(keys), (D, D))
        W_aper = _glorot(next(keys), (D, D))
        W = W.at[pa_r:pa_r + D, :2 * D].set(jnp.concatenate([W_per, W_aper], axis=1))
        W_gate = _glorot(next(keys), (2 * D, D))
        W = W.at[gate_r:gate_r + 2 * D, :D].set(W_gate)
        W_out = _glorot(next(keys), (D, D))
        W = W.at[out_r:out_r + D, :D].set(W_out)
        W_ms_l = _glorot(next(keys), (D, D)) * bn_scale       # multi-scale conv slice, BN folded
        W = W.at[ms_r:ms_r + D, :D].set(W_ms_l)

        ws = _glorot(next(keys), (2 * D, 1)).reshape(2 * D)   # anomaly-score weight row
        # per-layer V rows: b_pa, b_gate, ws, b_out, out-LN gamma/beta, layer-LN gamma/beta
        vrows += [zero2, zero2, ws, zero2, one_d, zero2, one_d, zero2]

    W_p1 = _glorot(next(keys), (D, H))
    W = W.at[lay["p1"]:lay["p1"] + D, :H].set(W_p1)
    W_p2 = _glorot(next(keys), (H, c_out))
    W = W.at[lay["p2"]:lay["p2"] + H, :c_out].set(W_p2)
    p["w_stack"] = W

    # global V rows: b_ms, b_p1, b_p2 (all zero by construction)
    vrows += [zero2, zero2, zero2]
    p["v_stack"] = jnp.stack(vrows)                           # (8L + 3, 2D)

    # true scalars in SMEM: [b_score(L) | w_asf(L) | b_asf]
    w_asf = _glorot(next(keys), (L, 1)).reshape(L)
    p["scalars"] = jnp.concatenate([jnp.zeros((L,), jnp.float32), w_asf,
                                    jnp.zeros((1,), jnp.float32)])
    return p


# -----------------------------------------------------------------------------
# Main
# -----------------------------------------------------------------------------
if __name__ == "__main__":
    # small config consistent with the module (eval mode: dropout = identity)
    B, seq_len, enc_in = 2, 16, 4
    d_model, e_layers, c_out = 32, 2, 4   # c_out == enc_in required by de-normalization

    key = jax.random.PRNGKey(0)
    k_x, k_p = jax.random.split(key)
    x_enc = jax.random.normal(k_x, (B, seq_len, enc_in), jnp.float32)
    params = make_params(k_p, enc_in=enc_in, d_model=d_model, e_layers=e_layers,
                         c_out=c_out, seq_len=seq_len)

    fwd = jax.jit(functools.partial(model_forward, d_model=d_model, c_out=c_out,
                                    num_layers=e_layers))
    dec_out, anomaly_scores = fwd(x_enc, params)
    jax.block_until_ready(dec_out)
    jax.block_until_ready(anomaly_scores)

    assert dec_out.shape == (B, seq_len, c_out)
    assert anomaly_scores.shape == (B, seq_len, 1)
    assert bool(jnp.isfinite(dec_out).all())
    assert bool(jnp.isfinite(anomaly_scores).all())
    print("KERNEL_OK")
</pallas_src>

<mosaic_0001>
module attributes {stable_mosaic.version = 11 : i64} {
  func.func @_timesnet_pki_kernel(%arg0: memref<32x48xf32, #tpu.memory_space<vmem>>, %arg1: memref<384x64xf32, #tpu.memory_space<vmem>>, %arg2: memref<19x64xf32, #tpu.memory_space<vmem>>, %arg3: memref<5xf32, #tpu.memory_space<smem>>, %arg4: memref<32x128xf32, #tpu.memory_space<vmem>>) attributes {dimension_semantics = [], scalar_prefetch = 0 : i64, scratch_operands = 0 : i64, tpu.core_type = #tpu.core_type<tc>} {
    %c0 = arith.constant 0 : index
    %c0_0 = arith.constant 0 : index
    %0 = vector.load %arg0[%c0, %c0_0] : memref<32x48xf32, #tpu.memory_space<vmem>>, vector<32x48xf32>
    %1 = vector.extract_strided_slice %0 {offsets = [0, 0], sizes = [32, 16], strides = [1, 1]} : vector<32x48xf32> to vector<32x16xf32>
    %2 = vector.extract_strided_slice %0 {offsets = [0, 16], sizes = [32, 32], strides = [1, 1]} : vector<32x48xf32> to vector<32x32xf32>
    %3 = vector.extract_strided_slice %1 {offsets = [0, 0], sizes = [16, 16], strides = [1, 1]} : vector<32x16xf32> to vector<16x16xf32>
    %cst = arith.constant dense<0.000000e+00> : vector<16xf32>
    %4 = vector.multi_reduction <add>, %3, %cst [0] : vector<16x16xf32> to vector<16xf32>
    %5 = vector.shape_cast %4 : vector<16xf32> to vector<1x16xf32>
    %cst_1 = arith.constant 1.600000e+01 : f32
    %6 = vector.broadcast %cst_1 : f32 to vector<1x16xf32>
    %7 = arith.divf %5, %6 : vector<1x16xf32>
    %8 = vector.broadcast %7 : vector<1x16xf32> to vector<16x16xf32>
    %9 = arith.subf %3, %8 : vector<16x16xf32>
    %10 = arith.mulf %9, %9 : vector<16x16xf32>
    %cst_2 = arith.constant dense<0.000000e+00> : vector<16xf32>
    %11 = vector.multi_reduction <add>, %10, %cst_2 [0] : vector<16x16xf32> to vector<16xf32>
    %12 = vector.shape_cast %11 : vector<16xf32> to vector<1x16xf32>
    %cst_3 = arith.constant 1.600000e+01 : f32
    %13 = vector.broadcast %cst_3 : f32 to vector<1x16xf32>
    %14 = arith.divf %12, %13 : vector<1x16xf32>
    %cst_4 = arith.constant 9.99999974E-6 : f32
    %15 = vector.broadcast %cst_4 : f32 to vector<1x16xf32>
    %16 = arith.addf %14, %15 : vector<1x16xf32>
    %17 = math.rsqrt %16 : vector<1x16xf32>
    %18 = vector.broadcast %17 : vector<1x16xf32> to vector<16x16xf32>
    %19 = arith.mulf %9, %18 : vector<16x16xf32>
    %20 = vector.extract_strided_slice %7 {offsets = [0, 4], sizes = [1, 4], strides = [1, 1]} : vector<1x16xf32> to vector<1x4xf32>
    %21 = vector.extract_strided_slice %14 {offsets = [0, 4], sizes = [1, 4], strides = [1, 1]} : vector<1x16xf32> to vector<1x4xf32>
    %cst_5 = arith.constant 9.99999974E-6 : f32
    %22 = vector.broadcast %cst_5 : f32 to vector<1x4xf32>
    %23 = arith.addf %21, %22 : vector<1x4xf32>
    %24 = math.sqrt %23 : vector<1x4xf32>
    %25 = vector.extract_strided_slice %1 {offsets = [16, 0], sizes = [16, 16], strides = [1, 1]} : vector<32x16xf32> to vector<16x16xf32>
    %cst_6 = arith.constant dense<0.000000e+00> : vector<16xf32>
    %26 = vector.multi_reduction <add>, %25, %cst_6 [0] : vector<16x16xf32> to vector<16xf32>
    %27 = vector.shape_cast %26 : vector<16xf32> to vector<1x16xf32>
    %cst_7 = arith.constant 1.600000e+01 : f32
    %28 = vector.broadcast %cst_7 : f32 to vector<1x16xf32>
    %29 = arith.divf %27, %28 : vector<1x16xf32>
    %30 = vector.broadcast %29 : vector<1x16xf32> to vector<16x16xf32>
    %31 = arith.subf %25, %30 : vector<16x16xf32>
    %32 = arith.mulf %31, %31 : vector<16x16xf32>
    %cst_8 = arith.constant dense<0.000000e+00> : vector<16xf32>
    %33 = vector.multi_reduction <add>, %32, %cst_8 [0] : vector<16x16xf32> to vector<16xf32>
    %34 = vector.shape_cast %33 : vector<16xf32> to vector<1x16xf32>
    %cst_9 = arith.constant 1.600000e+01 : f32
    %35 = vector.broadcast %cst_9 : f32 to vector<1x16xf32>
    %36 = arith.divf %34, %35 : vector<1x16xf32>
    %cst_10 = arith.constant 9.99999974E-6 : f32
    %37 = vector.broadcast %cst_10 : f32 to vector<1x16xf32>
    %38 = arith.addf %36, %37 : vector<1x16xf32>
    %39 = math.rsqrt %38 : vector<1x16xf32>
    %40 = vector.broadcast %39 : vector<1x16xf32> to vector<16x16xf32>
    %41 = arith.mulf %31, %40 : vector<16x16xf32>
    %42 = vector.extract_strided_slice %29 {offsets = [0, 4], sizes = [1, 4], strides = [1, 1]} : vector<1x16xf32> to vector<1x4xf32>
    %43 = vector.extract_strided_slice %36 {offsets = [0, 4], sizes = [1, 4], strides = [1, 1]} : vector<1x16xf32> to vector<1x4xf32>
    %cst_11 = arith.constant 9.99999974E-6 : f32
    %44 = vector.broadcast %cst_11 : f32 to vector<1x4xf32>
    %45 = arith.addf %43, %44 : vector<1x4xf32>
    %46 = math.sqrt %45 : vector<1x4xf32>
    %47 = tpu.concatenate %19, %41 in 0 : vector<16x16xf32>, vector<16x16xf32> -> vector<32x16xf32>
    %c0_12 = arith.constant 0 : index
    %c0_13 = arith.constant 0 : index
    %48 = vector.load %arg2[%c0_12, %c0_13] : memref<19x64xf32, #tpu.memory_space<vmem>>, vector<19x64xf32>
    %c0_14 = arith.constant 0 : index
    %c0_15 = arith.constant 0 : index
    %49 = vector.load %arg1[%c0_14, %c0_15] : memref<384x64xf32, #tpu.memory_space<vmem>>, vector<16x32xf32>
    %cst_16 = arith.constant dense<0.000000e+00> : vector<32x32xf32>
    %50 = tpu.matmul %47, %49, %cst_16 {dimension_numbers = #tpu.dot_dimension_numbers<[1], [0], [0], [1], [0, 0, 1, 1], [], []>} : vector<32x16xf32>, vector<16x32xf32>, vector<32x32xf32> -> vector<32x32xf32>
    %51 = arith.addf %50, %2 : vector<32x32xf32>
    %cst_17 = arith.constant 0.000000e+00 : f32
    %52 = vector.broadcast %cst_17 : f32 to vector<32x32xf32>
    %cst_18 = arith.constant 0.000000e+00 : f32
    %53 = vector.broadcast %cst_18 : f32 to vector<32x1xf32>
    %c16 = arith.constant 16 : index
    %c0_19 = arith.constant 0 : index
    %54 = vector.load %arg1[%c16, %c0_19] : memref<384x64xf32, #tpu.memory_space<vmem>>, vector<32x64xf32>
    %cst_20 = arith.constant dense<0.000000e+00> : vector<32x64xf32>
    %55 = tpu.matmul %51, %54, %cst_20 {dimension_numbers = #tpu.dot_dimension_numbers<[1], [0], [0], [1], [0, 0, 1, 1], [], []>} : vector<32x32xf32>, vector<32x64xf32>, vector<32x64xf32> -> vector<32x64xf32>
    %56 = vector.extract_strided_slice %48 {offsets = [0, 0], sizes = [1, 64], strides = [1, 1]} : vector<19x64xf32> to vector<1x64xf32>
    %57 = vector.broadcast %56 : vector<1x64xf32> to vector<32x64xf32>
    %58 = arith.addf %55, %57 : vector<32x64xf32>
    %59 = vector.extract_strided_slice %58 {offsets = [0, 0], sizes = [32, 32], strides = [1, 1]} : vector<32x64xf32> to vector<32x32xf32>
    %60 = arith.mulf %59, %59 : vector<32x32xf32>
    %61 = arith.mulf %59, %60 : vector<32x32xf32>
    %cst_21 = arith.constant 4.471500e-02 : f32
    %62 = vector.broadcast %cst_21 : f32 to vector<32x32xf32>
    %63 = arith.mulf %62, %61 : vector<32x32xf32>
    %64 = arith.addf %59, %63 : vector<32x32xf32>
    %cst_22 = arith.constant 0.797884583 : f32
    %65 = vector.broadcast %cst_22 : f32 to vector<32x32xf32>
    %66 = arith.mulf %65, %64 : vector<32x32xf32>
    %67 = math.tanh %66 : vector<32x32xf32>
    %cst_23 = arith.constant 1.000000e+00 : f32
    %68 = vector.broadcast %cst_23 : f32 to vector<32x32xf32>
    %69 = arith.addf %68, %67 : vector<32x32xf32>
    %cst_24 = arith.constant 5.000000e-01 : f32
    %70 = vector.broadcast %cst_24 : f32 to vector<32x32xf32>
    %71 = arith.mulf %70, %69 : vector<32x32xf32>
    %72 = arith.mulf %59, %71 : vector<32x32xf32>
    %73 = vector.extract_strided_slice %58 {offsets = [0, 32], sizes = [32, 32], strides = [1, 1]} : vector<32x64xf32> to vector<32x32xf32>
    %cst_25 = arith.constant 0.000000e+00 : f32
    %74 = vector.broadcast %cst_25 : f32 to vector<32x32xf32>
    %75 = arith.maximumf %73, %74 : vector<32x32xf32>
    %76 = tpu.concatenate %72, %75 in 1 : vector<32x32xf32>, vector<32x32xf32> -> vector<32x64xf32>
    %c48 = arith.constant 48 : index
    %c0_26 = arith.constant 0 : index
    %77 = vector.load %arg1[%c48, %c0_26] : memref<384x64xf32, #tpu.memory_space<vmem>>, vector<64x32xf32>
    %cst_27 = arith.constant dense<0.000000e+00> : vector<32x32xf32>
    %78 = tpu.matmul %76, %77, %cst_27 {dimension_numbers = #tpu.dot_dimension_numbers<[1], [0], [0], [1], [0, 0, 1, 1], [], []>} : vector<32x64xf32>, vector<64x32xf32>, vector<32x32xf32> -> vector<32x32xf32>
    %79 = vector.extract_strided_slice %48 {offsets = [1, 0], sizes = [1, 32], strides = [1, 1]} : vector<19x64xf32> to vector<1x32xf32>
    %80 = vector.broadcast %79 : vector<1x32xf32> to vector<32x32xf32>
    %81 = arith.addf %78, %80 : vector<32x32xf32>
    %82 = arith.negf %81 : vector<32x32xf32>
    %83 = math.exp %82 : vector<32x32xf32>
    %cst_28 = arith.constant 1.000000e+00 : f32
    %84 = vector.broadcast %cst_28 : f32 to vector<32x32xf32>
    %85 = arith.addf %84, %83 : vector<32x32xf32>
    %86 = arith.divf %84, %85 : vector<32x32xf32>
    %87 = vector.extract_strided_slice %48 {offsets = [2, 0], sizes = [1, 64], strides = [1, 1]} : vector<19x64xf32> to vector<1x64xf32>
    %88 = vector.broadcast %87 : vector<1x64xf32> to vector<32x64xf32>
    %89 = arith.mulf %76, %88 : vector<32x64xf32>
    %cst_29 = arith.constant dense<0.000000e+00> : vector<32xf32>
    %90 = vector.multi_reduction <add>, %89, %cst_29 [1] : vector<32x64xf32> to vector<32xf32>
    %91 = vector.shape_cast %90 : vector<32xf32> to vector<32x1xf32>
    %c0_30 = arith.constant 0 : index
    %92 = memref.load %arg3[%c0_30] : memref<5xf32, #tpu.memory_space<smem>>
    %93 = vector.broadcast %92 : f32 to vector<32x1xf32>
    %94 = arith.addf %91, %93 : vector<32x1xf32>
    %95 = arith.negf %94 : vector<32x1xf32>
    %96 = math.exp %95 : vector<32x1xf32>
    %cst_31 = arith.constant 1.000000e+00 : f32
    %97 = vector.broadcast %cst_31 : f32 to vector<32x1xf32>
    %98 = arith.addf %97, %96 : vector<32x1xf32>
    %99 = arith.divf %97, %98 : vector<32x1xf32>
    %100 = arith.mulf %86, %72 : vector<32x32xf32>
    %cst_32 = arith.constant 1.000000e+00 : f32
    %101 = vector.broadcast %cst_32 : f32 to vector<32x32xf32>
    %102 = arith.subf %101, %86 : vector<32x32xf32>
    %103 = arith.mulf %102, %75 : vector<32x32xf32>
    %104 = arith.addf %100, %103 : vector<32x32xf32>
    %105 = arith.addf %72, %75 : vector<32x32xf32>
    %cst_33 = arith.constant 5.000000e-01 : f32
    %106 = vector.broadcast %cst_33 : f32 to vector<32x32xf32>
    %107 = arith.mulf %106, %105 : vector<32x32xf32>
    %108 = arith.addf %104, %107 : vector<32x32xf32>
    %cst_34 = arith.constant 5.000000e-01 : f32
    %109 = vector.broadcast %cst_34 : f32 to vector<32x32xf32>
    %110 = arith.mulf %109, %108 : vector<32x32xf32>
    %c112 = arith.constant 112 : index
    %c0_35 = arith.constant 0 : index
    %111 = vector.load %arg1[%c112, %c0_35] : memref<384x64xf32, #tpu.memory_space<vmem>>, vector<32x32xf32>
    %cst_36 = arith.constant dense<0.000000e+00> : vector<32x32xf32>
    %112 = tpu.matmul %110, %111, %cst_36 {dimension_numbers = #tpu.dot_dimension_numbers<[1], [0], [0], [1], [0, 0, 1, 1], [], []>} : vector<32x32xf32>, vector<32x32xf32>, vector<32x32xf32> -> vector<32x32xf32>
    %113 = vector.extract_strided_slice %48 {offsets = [3, 0], sizes = [1, 32], strides = [1, 1]} : vector<19x64xf32> to vector<1x32xf32>
    %114 = vector.broadcast %113 : vector<1x32xf32> to vector<32x32xf32>
    %115 = arith.addf %112, %114 : vector<32x32xf32>
    %cst_37 = arith.constant dense<0.000000e+00> : vector<32xf32>
    %116 = vector.multi_reduction <add>, %115, %cst_37 [1] : vector<32x32xf32> to vector<32xf32>
    %117 = vector.shape_cast %116 : vector<32xf32> to vector<32x1xf32>
    %cst_38 = arith.constant 3.200000e+01 : f32
    %118 = vector.broadcast %cst_38 : f32 to vector<32x1xf32>
    %119 = arith.divf %117, %118 : vector<32x1xf32>
    %120 = vector.broadcast %119 : vector<32x1xf32> to vector<32x32xf32>
    %121 = arith.subf %115, %120 : vector<32x32xf32>
    %122 = arith.mulf %121, %121 : vector<32x32xf32>
    %cst_39 = arith.constant dense<0.000000e+00> : vector<32xf32>
    %123 = vector.multi_reduction <add>, %122, %cst_39 [1] : vector<32x32xf32> to vector<32xf32>
    %124 = vector.shape_cast %123 : vector<32xf32> to vector<32x1xf32>
    %cst_40 = arith.constant 3.200000e+01 : f32
    %125 = vector.broadcast %cst_40 : f32 to vector<32x1xf32>
    %126 = arith.divf %124, %125 : vector<32x1xf32>
    %127 = vector.broadcast %119 : vector<32x1xf32> to vector<32x32xf32>
    %128 = arith.subf %115, %127 : vector<32x32xf32>
    %cst_41 = arith.constant 9.99999974E-6 : f32
    %129 = vector.broadcast %cst_41 : f32 to vector<32x1xf32>
    %130 = arith.addf %126, %129 : vector<32x1xf32>
    %131 = math.rsqrt %130 : vector<32x1xf32>
    %132 = vector.broadcast %131 : vector<32x1xf32> to vector<32x32xf32>
    %133 = arith.mulf %128, %132 : vector<32x32xf32>
    %134 = vector.extract_strided_slice %48 {offsets = [4, 0], sizes = [1, 32], strides = [1, 1]} : vector<19x64xf32> to vector<1x32xf32>
    %135 = vector.broadcast %134 : vector<1x32xf32> to vector<32x32xf32>
    %136 = arith.mulf %133, %135 : vector<32x32xf32>
    %137 = vector.extract_strided_slice %48 {offsets = [5, 0], sizes = [1, 32], strides = [1, 1]} : vector<19x64xf32> to vector<1x32xf32>
    %138 = vector.broadcast %137 : vector<1x32xf32> to vector<32x32xf32>
    %139 = arith.addf %136, %138 : vector<32x32xf32>
    %cst_42 = arith.constant 0.000000e+00 : f32
    %140 = vector.broadcast %cst_42 : f32 to vector<32x32xf32>
    %141 = arith.maximumf %139, %140 : vector<32x32xf32>
    %cst_43 = arith.constant 2.000000e+00 : f32
    %142 = vector.broadcast %cst_43 : f32 to vector<32x32xf32>
    %143 = arith.mulf %142, %51 : vector<32x32xf32>
    %144 = arith.addf %141, %143 : vector<32x32xf32>
    %cst_44 = arith.constant dense<0.000000e+00> : vector<32xf32>
    %145 = vector.multi_reduction <add>, %144, %cst_44 [1] : vector<32x32xf32> to vector<32xf32>
    %146 = vector.shape_cast %145 : vector<32xf32> to vector<32x1xf32>
    %cst_45 = arith.constant 3.200000e+01 : f32
    %147 = vector.broadcast %cst_45 : f32 to vector<32x1xf32>
    %148 = arith.divf %146, %147 : vector<32x1xf32>
    %149 = vector.broadcast %148 : vector<32x1xf32> to vector<32x32xf32>
    %150 = arith.subf %144, %149 : vector<32x32xf32>
    %151 = arith.mulf %150, %150 : vector<32x32xf32>
    %cst_46 = arith.constant dense<0.000000e+00> : vector<32xf32>
    %152 = vector.multi_reduction <add>, %151, %cst_46 [1] : vector<32x32xf32> to vector<32xf32>
    %153 = vector.shape_cast %152 : vector<32xf32> to vector<32x1xf32>
    %cst_47 = arith.constant 3.200000e+01 : f32
    %154 = vector.broadcast %cst_47 : f32 to vector<32x1xf32>
    %155 = arith.divf %153, %154 : vector<32x1xf32>
    %156 = vector.broadcast %148 : vector<32x1xf32> to vector<32x32xf32>
    %157 = arith.subf %144, %156 : vector<32x32xf32>
    %cst_48 = arith.constant 9.99999974E-6 : f32
    %158 = vector.broadcast %cst_48 : f32 to vector<32x1xf32>
    %159 = arith.addf %155, %158 : vector<32x1xf32>
    %160 = math.rsqrt %159 : vector<32x1xf32>
    %161 = vector.broadcast %160 : vector<32x1xf32> to vector<32x32xf32>
    %162 = arith.mulf %157, %161 : vector<32x32xf32>
    %163 = vector.extract_strided_slice %48 {offsets = [6, 0], sizes = [1, 32], strides = [1, 1]} : vector<19x64xf32> to vector<1x32xf32>
    %164 = vector.broadcast %163 : vector<1x32xf32> to vector<32x32xf32>
    %165 = arith.mulf %162, %164 : vector<32x32xf32>
    %166 = vector.extract_strided_slice %48 {offsets = [7, 0], sizes = [1, 32], strides = [1, 1]} : vector<19x64xf32> to vector<1x32xf32>
    %167 = vector.broadcast %166 : vector<1x32xf32> to vector<32x32xf32>
    %168 = arith.addf %165, %167 : vector<32x32xf32>
    %c144 = arith.constant 144 : index
    %c0_49 = arith.constant 0 : index
    %169 = vector.load %arg1[%c144, %c0_49] : memref<384x64xf32, #tpu.memory_space<vmem>>, vector<32x32xf32>
    %cst_50 = arith.constant dense<0.000000e+00> : vector<32x32xf32>
    %170 = tpu.matmul %168, %169, %cst_50 {dimension_numbers = #tpu.dot_dimension_numbers<[1], [0], [0], [1], [0, 0, 1, 1], [], []>} : vector<32x32xf32>, vector<32x32xf32>, vector<32x32xf32> -> vector<32x32xf32>
    %171 = arith.addf %52, %170 : vector<32x32xf32>
    %c2 = arith.constant 2 : index
    %172 = memref.load %arg3[%c2] : memref<5xf32, #tpu.memory_space<smem>>
    %173 = vector.broadcast %172 : f32 to vector<32x1xf32>
    %174 = arith.mulf %99, %173 : vector<32x1xf32>
    %175 = arith.addf %53, %174 : vector<32x1xf32>
    %c176 = arith.constant 176 : index
    %c0_51 = arith.constant 0 : index
    %176 = vector.load %arg1[%c176, %c0_51] : memref<384x64xf32, #tpu.memory_space<vmem>>, vector<32x64xf32>
    %cst_52 = arith.constant dense<0.000000e+00> : vector<32x64xf32>
    %177 = tpu.matmul %168, %176, %cst_52 {dimension_numbers = #tpu.dot_dimension_numbers<[1], [0], [0], [1], [0, 0, 1, 1], [], []>} : vector<32x32xf32>, vector<32x64xf32>, vector<32x64xf32> -> vector<32x64xf32>
    %178 = vector.extract_strided_slice %48 {offsets = [8, 0], sizes = [1, 64], strides = [1, 1]} : vector<19x64xf32> to vector<1x64xf32>
    %179 = vector.broadcast %178 : vector<1x64xf32> to vector<32x64xf32>
    %180 = arith.addf %177, %179 : vector<32x64xf32>
    %181 = vector.extract_strided_slice %180 {offsets = [0, 0], sizes = [32, 32], strides = [1, 1]} : vector<32x64xf32> to vector<32x32xf32>
    %182 = arith.mulf %181, %181 : vector<32x32xf32>
    %183 = arith.mulf %181, %182 : vector<32x32xf32>
    %cst_53 = arith.constant 4.471500e-02 : f32
    %184 = vector.broadcast %cst_53 : f32 to vector<32x32xf32>
    %185 = arith.mulf %184, %183 : vector<32x32xf32>
    %186 = arith.addf %181, %185 : vector<32x32xf32>
    %cst_54 = arith.constant 0.797884583 : f32
    %187 = vector.broadcast %cst_54 : f32 to vector<32x32xf32>
    %188 = arith.mulf %187, %186 : vector<32x32xf32>
    %189 = math.tanh %188 : vector<32x32xf32>
    %cst_55 = arith.constant 1.000000e+00 : f32
    %190 = vector.broadcast %cst_55 : f32 to vector<32x32xf32>
    %191 = arith.addf %190, %189 : vector<32x32xf32>
    %cst_56 = arith.constant 5.000000e-01 : f32
    %192 = vector.broadcast %cst_56 : f32 to vector<32x32xf32>
    %193 = arith.mulf %192, %191 : vector<32x32xf32>
    %194 = arith.mulf %181, %193 : vector<32x32xf32>
    %195 = vector.extract_strided_slice %180 {offsets = [0, 32], sizes = [32, 32], strides = [1, 1]} : vector<32x64xf32> to vector<32x32xf32>
    %cst_57 = arith.constant 0.000000e+00 : f32
    %196 = vector.broadcast %cst_57 : f32 to vector<32x32xf32>
    %197 = arith.maximumf %195, %196 : vector<32x32xf32>
    %198 = tpu.concatenate %194, %197 in 1 : vector<32x32xf32>, vector<32x32xf32> -> vector<32x64xf32>
    %c208 = arith.constant 208 : index
    %c0_58 = arith.constant 0 : index
    %199 = vector.load %arg1[%c208, %c0_58] : memref<384x64xf32, #tpu.memory_space<vmem>>, vector<64x32xf32>
    %cst_59 = arith.constant dense<0.000000e+00> : vector<32x32xf32>
    %200 = tpu.matmul %198, %199, %cst_59 {dimension_numbers = #tpu.dot_dimension_numbers<[1], [0], [0], [1], [0, 0, 1, 1], [], []>} : vector<32x64xf32>, vector<64x32xf32>, vector<32x32xf32> -> vector<32x32xf32>
    %201 = vector.extract_strided_slice %48 {offsets = [9, 0], sizes = [1, 32], strides = [1, 1]} : vector<19x64xf32> to vector<1x32xf32>
    %202 = vector.broadcast %201 : vector<1x32xf32> to vector<32x32xf32>
    %203 = arith.addf %200, %202 : vector<32x32xf32>
    %204 = arith.negf %203 : vector<32x32xf32>
    %205 = math.exp %204 : vector<32x32xf32>
    %cst_60 = arith.constant 1.000000e+00 : f32
    %206 = vector.broadcast %cst_60 : f32 to vector<32x32xf32>
    %207 = arith.addf %206, %205 : vector<32x32xf32>
    %208 = arith.divf %206, %207 : vector<32x32xf32>
    %209 = vector.extract_strided_slice %48 {offsets = [10, 0], sizes = [1, 64], strides = [1, 1]} : vector<19x64xf32> to vector<1x64xf32>
    %210 = vector.broadcast %209 : vector<1x64xf32> to vector<32x64xf32>
    %211 = arith.mulf %198, %210 : vector<32x64xf32>
    %cst_61 = arith.constant dense<0.000000e+00> : vector<32xf32>
    %212 = vector.multi_reduction <add>, %211, %cst_61 [1] : vector<32x64xf32> to vector<32xf32>
    %213 = vector.shape_cast %212 : vector<32xf32> to vector<32x1xf32>
    %c1 = arith.constant 1 : index
    %214 = memref.load %arg3[%c1] : memref<5xf32, #tpu.memory_space<smem>>
    %215 = vector.broadcast %214 : f32 to vector<32x1xf32>
    %216 = arith.addf %213, %215 : vector<32x1xf32>
    %217 = arith.negf %216 : vector<32x1xf32>
    %218 = math.exp %217 : vector<32x1xf32>
    %cst_62 = arith.constant 1.000000e+00 : f32
    %219 = vector.broadcast %cst_62 : f32 to vector<32x1xf32>
    %220 = arith.addf %219, %218 : vector<32x1xf32>
    %221 = arith.divf %219, %220 : vector<32x1xf32>
    %222 = arith.mulf %208, %194 : vector<32x32xf32>
    %cst_63 = arith.constant 1.000000e+00 : f32
    %223 = vector.broadcast %cst_63 : f32 to vector<32x32xf32>
    %224 = arith.subf %223, %208 : vector<32x32xf32>
    %225 = arith.mulf %224, %197 : vector<32x32xf32>
    %226 = arith.addf %222, %225 : vector<32x32xf32>
    %227 = arith.addf %194, %197 : vector<32x32xf32>
    %cst_64 = arith.constant 5.000000e-01 : f32
    %228 = vector.broadcast %cst_64 : f32 to vector<32x32xf32>
    %229 = arith.mulf %228, %227 : vector<32x32xf32>
    %230 = arith.addf %226, %229 : vector<32x32xf32>
    %cst_65 = arith.constant 5.000000e-01 : f32
    %231 = vector.broadcast %cst_65 : f32 to vector<32x32xf32>
    %232 = arith.mulf %231, %230 : vector<32x32xf32>
    %c272 = arith.constant 272 : index
    %c0_66 = arith.constant 0 : index
    %233 = vector.load %arg1[%c272, %c0_66] : memref<384x64xf32, #tpu.memory_space<vmem>>, vector<32x32xf32>
    %cst_67 = arith.constant dense<0.000000e+00> : vector<32x32xf32>
    %234 = tpu.matmul %232, %233, %cst_67 {dimension_numbers = #tpu.dot_dimension_numbers<[1], [0], [0], [1], [0, 0, 1, 1], [], []>} : vector<32x32xf32>, vector<32x32xf32>, vector<32x32xf32> -> vector<32x32xf32>
    %235 = vector.extract_strided_slice %48 {offsets = [11, 0], sizes = [1, 32], strides = [1, 1]} : vector<19x64xf32> to vector<1x32xf32>
    %236 = vector.broadcast %235 : vector<1x32xf32> to vector<32x32xf32>
    %237 = arith.addf %234, %236 : vector<32x32xf32>
    %cst_68 = arith.constant dense<0.000000e+00> : vector<32xf32>
    %238 = vector.multi_reduction <add>, %237, %cst_68 [1] : vector<32x32xf32> to vector<32xf32>
    %239 = vector.shape_cast %238 : vector<32xf32> to vector<32x1xf32>
    %cst_69 = arith.constant 3.200000e+01 : f32
    %240 = vector.broadcast %cst_69 : f32 to vector<32x1xf32>
    %241 = arith.divf %239, %240 : vector<32x1xf32>
    %242 = vector.broadcast %241 : vector<32x1xf32> to vector<32x32xf32>
    %243 = arith.subf %237, %242 : vector<32x32xf32>
    %244 = arith.mulf %243, %243 : vector<32x32xf32>
    %cst_70 = arith.constant dense<0.000000e+00> : vector<32xf32>
    %245 = vector.multi_reduction <add>, %244, %cst_70 [1] : vector<32x32xf32> to vector<32xf32>
    %246 = vector.shape_cast %245 : vector<32xf32> to vector<32x1xf32>
    %cst_71 = arith.constant 3.200000e+01 : f32
    %247 = vector.broadcast %cst_71 : f32 to vector<32x1xf32>
    %248 = arith.divf %246, %247 : vector<32x1xf32>
    %249 = vector.broadcast %241 : vector<32x1xf32> to vector<32x32xf32>
    %250 = arith.subf %237, %249 : vector<32x32xf32>
    %cst_72 = arith.constant 9.99999974E-6 : f32
    %251 = vector.broadcast %cst_72 : f32 to vector<32x1xf32>
    %252 = arith.addf %248, %251 : vector<32x1xf32>
    %253 = math.rsqrt %252 : vector<32x1xf32>
    %254 = vector.broadcast %253 : vector<32x1xf32> to vector<32x32xf32>
    %255 = arith.mulf %250, %254 : vector<32x32xf32>
    %256 = vector.extract_strided_slice %48 {offsets = [12, 0], sizes = [1, 32], strides = [1, 1]} : vector<19x64xf32> to vector<1x32xf32>
    %257 = vector.broadcast %256 : vector<1x32xf32> to vector<32x32xf32>
    %258 = arith.mulf %255, %257 : vector<32x32xf32>
    %259 = vector.extract_strided_slice %48 {offsets = [13, 0], sizes = [1, 32], strides = [1, 1]} : vector<19x64xf32> to vector<1x32xf32>
    %260 = vector.broadcast %259 : vector<1x32xf32> to vector<32x32xf32>
    %261 = arith.addf %258, %260 : vector<32x32xf32>
    %cst_73 = arith.constant 0.000000e+00 : f32
    %262 = vector.broadcast %cst_73 : f32 to vector<32x32xf32>
    %263 = arith.maximumf %261, %262 : vector<32x32xf32>
    %cst_74 = arith.constant 2.000000e+00 : f32
    %264 = vector.broadcast %cst_74 : f32 to vector<32x32xf32>
    %265 = arith.mulf %264, %168 : vector<32x32xf32>
    %266 = arith.addf %263, %265 : vector<32x32xf32>
    %cst_75 = arith.constant dense<0.000000e+00> : vector<32xf32>
    %267 = vector.multi_reduction <add>, %266, %cst_75 [1] : vector<32x32xf32> to vector<32xf32>
    %268 = vector.shape_cast %267 : vector<32xf32> to vector<32x1xf32>
    %cst_76 = arith.constant 3.200000e+01 : f32
    %269 = vector.broadcast %cst_76 : f32 to vector<32x1xf32>
    %270 = arith.divf %268, %269 : vector<32x1xf32>
    %271 = vector.broadcast %270 : vector<32x1xf32> to vector<32x32xf32>
    %272 = arith.subf %266, %271 : vector<32x32xf32>
    %273 = arith.mulf %272, %272 : vector<32x32xf32>
    %cst_77 = arith.constant dense<0.000000e+00> : vector<32xf32>
    %274 = vector.multi_reduction <add>, %273, %cst_77 [1] : vector<32x32xf32> to vector<32xf32>
    %275 = vector.shape_cast %274 : vector<32xf32> to vector<32x1xf32>
    %cst_78 = arith.constant 3.200000e+01 : f32
    %276 = vector.broadcast %cst_78 : f32 to vector<32x1xf32>
    %277 = arith.divf %275, %276 : vector<32x1xf32>
    %278 = vector.broadcast %270 : vector<32x1xf32> to vector<32x32xf32>
    %279 = arith.subf %266, %278 : vector<32x32xf32>
    %cst_79 = arith.constant 9.99999974E-6 : f32
    %280 = vector.broadcast %cst_79 : f32 to vector<32x1xf32>
    %281 = arith.addf %277, %280 : vector<32x1xf32>
    %282 = math.rsqrt %281 : vector<32x1xf32>
    %283 = vector.broadcast %282 : vector<32x1xf32> to vector<32x32xf32>
    %284 = arith.mulf %279, %283 : vector<32x32xf32>
    %285 = vector.extract_strided_slice %48 {offsets = [14, 0], sizes = [1, 32], strides = [1, 1]} : vector<19x64xf32> to vector<1x32xf32>
    %286 = vector.broadcast %285 : vector<1x32xf32> to vector<32x32xf32>
    %287 = arith.mulf %284, %286 : vector<32x32xf32>
    %288 = vector.extract_strided_slice %48 {offsets = [15, 0], sizes = [1, 32], strides = [1, 1]} : vector<19x64xf32> to vector<1x32xf32>
    %289 = vector.broadcast %288 : vector<1x32xf32> to vector<32x32xf32>
    %290 = arith.addf %287, %289 : vector<32x32xf32>
    %c304 = arith.constant 304 : index
    %c0_80 = arith.constant 0 : index
    %291 = vector.load %arg1[%c304, %c0_80] : memref<384x64xf32, #tpu.memory_space<vmem>>, vector<32x32xf32>
    %cst_81 = arith.constant dense<0.000000e+00> : vector<32x32xf32>
    %292 = tpu.matmul %290, %291, %cst_81 {dimension_numbers = #tpu.dot_dimension_numbers<[1], [0], [0], [1], [0, 0, 1, 1], [], []>} : vector<32x32xf32>, vector<32x32xf32>, vector<32x32xf32> -> vector<32x32xf32>
    %293 = arith.addf %171, %292 : vector<32x32xf32>
    %c3 = arith.constant 3 : index
    %294 = memref.load %arg3[%c3] : memref<5xf32, #tpu.memory_space<smem>>
    %295 = vector.broadcast %294 : f32 to vector<32x1xf32>
    %296 = arith.mulf %221, %295 : vector<32x1xf32>
    %297 = arith.addf %175, %296 : vector<32x1xf32>
    %298 = vector.extract_strided_slice %48 {offsets = [16, 0], sizes = [1, 32], strides = [1, 1]} : vector<19x64xf32> to vector<1x32xf32>
    %299 = vector.broadcast %298 : vector<1x32xf32> to vector<32x32xf32>
    %300 = arith.addf %293, %299 : vector<32x32xf32>
    %cst_82 = arith.constant 0.000000e+00 : f32
    %301 = vector.broadcast %cst_82 : f32 to vector<32x32xf32>
    %302 = arith.maximumf %300, %301 : vector<32x32xf32>
    %303 = arith.addf %290, %302 : vector<32x32xf32>
    %cst_83 = arith.constant 5.000000e-01 : f32
    %304 = vector.broadcast %cst_83 : f32 to vector<32x32xf32>
    %305 = arith.mulf %304, %303 : vector<32x32xf32>
    %c336 = arith.constant 336 : index
    %c0_84 = arith.constant 0 : index
    %306 = vector.load %arg1[%c336, %c0_84] : memref<384x64xf32, #tpu.memory_space<vmem>>, vector<32x16xf32>
    %cst_85 = arith.constant dense<0.000000e+00> : vector<32x16xf32>
    %307 = tpu.matmul %305, %306, %cst_85 {dimension_numbers = #tpu.dot_dimension_numbers<[1], [0], [0], [1], [0, 0, 1, 1], [], []>} : vector<32x32xf32>, vector<32x16xf32>, vector<32x16xf32> -> vector<32x16xf32>
    %308 = vector.extract_strided_slice %48 {offsets = [17, 0], sizes = [1, 16], strides = [1, 1]} : vector<19x64xf32> to vector<1x16xf32>
    %309 = vector.broadcast %308 : vector<1x16xf32> to vector<32x16xf32>
    %310 = arith.addf %307, %309 : vector<32x16xf32>
    %cst_86 = arith.constant 0.000000e+00 : f32
    %311 = vector.broadcast %cst_86 : f32 to vector<32x16xf32>
    %312 = arith.maximumf %310, %311 : vector<32x16xf32>
    %c368 = arith.constant 368 : index
    %c0_87 = arith.constant 0 : index
    %313 = vector.load %arg1[%c368, %c0_87] : memref<384x64xf32, #tpu.memory_space<vmem>>, vector<16x4xf32>
    %cst_88 = arith.constant dense<0.000000e+00> : vector<32x4xf32>
    %314 = tpu.matmul %312, %313, %cst_88 {dimension_numbers = #tpu.dot_dimension_numbers<[1], [0], [0], [1], [0, 0, 1, 1], [], []>} : vector<32x16xf32>, vector<16x4xf32>, vector<32x4xf32> -> vector<32x4xf32>
    %315 = vector.extract_strided_slice %48 {offsets = [18, 0], sizes = [1, 4], strides = [1, 1]} : vector<19x64xf32> to vector<1x4xf32>
    %316 = vector.broadcast %315 : vector<1x4xf32> to vector<32x4xf32>
    %317 = arith.addf %314, %316 : vector<32x4xf32>
    %318 = vector.extract_strided_slice %317 {offsets = [0, 0], sizes = [16, 4], strides = [1, 1]} : vector<32x4xf32> to vector<16x4xf32>
    %319 = vector.broadcast %24 : vector<1x4xf32> to vector<16x4xf32>
    %320 = arith.mulf %318, %319 : vector<16x4xf32>
    %321 = vector.broadcast %20 : vector<1x4xf32> to vector<16x4xf32>
    %322 = arith.addf %320, %321 : vector<16x4xf32>
    %323 = vector.extract_strided_slice %317 {offsets = [16, 0], sizes = [16, 4], strides = [1, 1]} : vector<32x4xf32> to vector<16x4xf32>
    %324 = vector.broadcast %46 : vector<1x4xf32> to vector<16x4xf32>
    %325 = arith.mulf %323, %324 : vector<16x4xf32>
    %326 = vector.broadcast %42 : vector<1x4xf32> to vector<16x4xf32>
    %327 = arith.addf %325, %326 : vector<16x4xf32>
    %328 = tpu.concatenate %322, %327 in 0 : vector<16x4xf32>, vector<16x4xf32> -> vector<32x4xf32>
    %c4 = arith.constant 4 : index
    %329 = memref.load %arg3[%c4] : memref<5xf32, #tpu.memory_space<smem>>
    %330 = vector.broadcast %329 : f32 to vector<32x1xf32>
    %331 = arith.addf %297, %330 : vector<32x1xf32>
    %332 = arith.negf %331 : vector<32x1xf32>
    %333 = math.exp %332 : vector<32x1xf32>
    %cst_89 = arith.constant 1.000000e+00 : f32
    %334 = vector.broadcast %cst_89 : f32 to vector<32x1xf32>
    %335 = arith.addf %334, %333 : vector<32x1xf32>
    %336 = arith.divf %334, %335 : vector<32x1xf32>
    %cst_90 = arith.constant 0.000000e+00 : f32
    %337 = vector.broadcast %cst_90 : f32 to vector<32x123xf32>
    %338 = tpu.concatenate %328, %336, %337 in 1 : vector<32x4xf32>, vector<32x1xf32>, vector<32x123xf32> -> vector<32x128xf32>
    %c0_91 = arith.constant 0 : index
    %c0_92 = arith.constant 0 : index
    %339 = vector.load %arg4[%c0_91, %c0_92] : memref<32x128xf32, #tpu.memory_space<vmem>>, vector<32x128xf32>
    tpu.vector_store %arg4[%c0_91, %c0_92], %338 {strides = array<i32>} : memref<32x128xf32, #tpu.memory_space<vmem>>, vector<32x128xf32>,
    return
  }
}

</mosaic_0001>

<llo_original>
// kernel: model_forward.1
$region0: #{model_forward.1}
  #allocation0 [shape = 'u32[]', space=smem, size = 0x4, offset = 0x4, fixed_abs, tag = 'smem constant byte address 0x4 - core index']
  #allocation1 [shape = 'u32[144,128]{1,0:T(1,128)}', space=vmem, size = 0x12000, scoped, tag = 'internal scratch']
  %s0 = inlined_call_operand.vmem [shape: f32[32,48], index: 0, kind: input, shape index: {}]
  %s1 = inlined_call_operand.vmem [shape: f32[384,64], index: 1, kind: input, shape index: {}]
  %s2 = inlined_call_operand.vmem [shape: f32[19,64], index: 2, kind: input, shape index: {}]
  %s3 = inlined_call_operand.vmem [shape: f32[5], index: 3, kind: input, shape index: {}]
  %s4 = inlined_call_operand.vmem [shape: f32[32,128], index: 4, kind: output, shape index: {}]
  %s5 = sld [smem:[#allocation0]]
  $region30: #{model_forward.1} parent=0
    _
  %s7 = ssub.s32 1, %s5
  %s8 = scalar_select 0, %s7, %s5
  $region1: #{model_forward.1} parent=0
    #allocation2 [shape = 'u8[512]{0}', space=smem, size = 0x200, scoped, tag = 'input window, operand 3, single buffered']
    #allocation3 [shape = 's32[1]{0}', space=sflag, size = 0x4, scoped, tag = 'scoped memory for model_forward.1']
    %9 = vsyncpa [#allocation3], 0
    // Predicated region
    $region2: #{model_forward.1} parent=1 // pred_check
      _
    $region3: #{model_forward.1} parent=1 // pred_check_branch
      %11 = sbr.rel (0) target = $region5
    $region4: #{model_forward.1} parent=1 // pred_region
      _
    $region5: #{model_forward.1} parent=1 // pred_fallthru
      _
    // Predicated region
    $region6: #{model_forward.1} parent=1 // pred_check
      _
    $region7: #{model_forward.1} parent=1 // pred_check_branch
      %13 = sbr.rel (0) target = $region9
    $region8: #{model_forward.1} parent=1 // pred_region
      _
    $region9: #{model_forward.1} parent=1 // pred_fallthru
      _
    // Predicated region
    $region10: #{model_forward.1} parent=1 // pred_check
      _
    $region11: #{model_forward.1} parent=1 // pred_check_branch
      %15 = sbr.rel (0) target = $region13
    $region12: #{model_forward.1} parent=1 // pred_region
      _
    $region13: #{model_forward.1} parent=1 // pred_fallthru
      _
    // Predicated region
    $region14: #{model_forward.1} parent=1 // pred_check
      _
    $region15: #{model_forward.1} parent=1 // pred_check_branch
      %17 = sbr.rel (0) target = $region17
    $region16: #{model_forward.1} parent=1 // pred_region
      %s19 = ssub.s32 16, 16
      %20 = vsyncadd [#allocation3], %s19
      %s22 = sshll.u32 %s3, 4
      %s23 = int_to_ptr.vmem [resolvable:$true] %s22
      %25 = dma.vmem_to_smem %s23, 16, [#allocation2], [#allocation3]
    $region17: #{model_forward.1} parent=1 // pred_fallthru
      _
    // Predicated region
    $region18: #{model_forward.1} parent=1 // pred_check
      _
    $region19: #{model_forward.1} parent=1 // pred_check_branch
      %27 = sbr.rel (0) target = $region21
    $region20: #{model_forward.1} parent=1 // pred_region
      %28 = dma.done [#allocation3], 16
    $region21: #{model_forward.1} parent=1 // pred_fallthru
      _
    %29 = sfence
    %v30 = vld [vmem:[%s0] sm:$0xff]
    %v31 = vld [vmem:[%s0 + $0x8] sm:$0xff]
    %v32 = vld [vmem:[%s0 + $0x10] sm:$0xff]
    %v33 = vld [vmem:[%s0 + $0x18] sm:$0xff]
    %vm34 = vcmask 130048
    %v35 = vsel %vm34, %v30, 0.0
    %v36 = vsel %vm34, %v31, 0.0
    %v37 = vadd.f32 %v35, %v36
    %v38 = vrot.slane %v37, 4
    %v39 = vadd.f32 %v37, %v38
    %v40 = vrot.slane %v39, 2
    %v41 = vadd.f32 %v39, %v40
    %v42 = vrot.slane %v41, 1
    %v43 = vadd.f32 %v41, %v42
    %v44 = vrcp.pop 16.0
    %v45 = vmul.f32 %v43, %v44
    %v46 = vsub.f32 %v30, %v45
    %v47 = vsub.f32 %v31, %v45
    %v48 = vmul.f32 %v46, %v46
    %v49 = vmul.f32 %v47, %v47
    %v50 = vsel %vm34, %v48, 0.0
    %v51 = vsel %vm34, %v49, 0.0
    %v52 = vadd.f32 %v50, %v51
    %v53 = vrot.slane %v52, 4
    %v54 = vadd.f32 %v52, %v53
    %v55 = vrot.slane %v54, 2
    %v56 = vadd.f32 %v54, %v55
    %v57 = vrot.slane %v56, 1
    %v58 = vadd.f32 %v56, %v57
    %v59 = vmul.f32 %v58, %v44
    %v60 = vadd.f32 %v59, 1e-05
    %v61 = vrsqrt.pop %v60
    %v62 = vmul.f32 %v46, %v61
    %v63 = vmul.f32 %v47, %v61
    %v64 = vrsqrt.pop %v60
    %v65 = vmul.f32 %v60, %v64
    %vm66 = vcmp.eq.f32.partialorder %v60, inf
    %v67 = vsel %vm66, %v60, %v65
    %vm68 = vcmp.eq.f32.partialorder %v60, 0.0
    %v69 = vand.u32 %v60, 2147483648
    %v70 = vsel %vm68, %v69, %v67
    %v71 = vsel %vm34, %v32, 0.0
    %v72 = vsel %vm34, %v33, 0.0
    %v73 = vadd.f32 %v71, %v72
    %v74 = vrot.slane %v73, 4
    %v75 = vadd.f32 %v73, %v74
    %v76 = vrot.slane %v75, 2
    %v77 = vadd.f32 %v75, %v76
    %v78 = vrot.slane %v77, 1
    %v79 = vadd.f32 %v77, %v78
    %v80 = vmul.f32 %v79, %v44
    %v81 = vsub.f32 %v32, %v80
    %v82 = vsub.f32 %v33, %v80
    %v83 = vmul.f32 %v81, %v81
    %v84 = vmul.f32 %v82, %v82
    %v85 = vsel %vm34, %v83, 0.0
    %v86 = vsel %vm34, %v84, 0.0
    %v87 = vadd.f32 %v85, %v86
    %v88 = vrot.slane %v87, 4
    %v89 = vadd.f32 %v87, %v88
    %v90 = vrot.slane %v89, 2
    %v91 = vadd.f32 %v89, %v90
    %v92 = vrot.slane %v91, 1
    %v93 = vadd.f32 %v91, %v92
    %v94 = vmul.f32 %v93, %v44
    %v95 = vadd.f32 %v94, 1e-05
    %v96 = vrsqrt.pop %v95
    %v97 = vmul.f32 %v81, %v96
    %v98 = vmul.f32 %v82, %v96
    %v99 = vrsqrt.pop %v95
    %v100 = vmul.f32 %v95, %v99
    %vm101 = vcmp.eq.f32.partialorder %v95, inf
    %v102 = vsel %vm101, %v95, %v100
    %vm103 = vcmp.eq.f32.partialorder %v95, 0.0
    %v104 = vand.u32 %v95, 2147483648
    %v105 = vsel %vm103, %v104, %v102
    %v106 = vld [vmem:[%s2] sm:$0xff]
    %v107 = vld [vmem:[%s2 + $0x8] sm:$0xff]
    %v108 = vld [vmem:[%s2 + $0x10] sm:$0x7]
    %v109 = vld [vmem:[%s1] sm:$0xff]
    %v110 = vld [vmem:[%s1 + $0x8] sm:$0xff]
    %115 = vrot.lane.b32.xlu0 %v30, 112
    %v116 = vpop.permute.xlu0 %115
    %117 = vrot.lane.b32.xlu0 %v31, 112
    %v118 = vpop.permute.xlu0 %117
    %119 = vrot.lane.b32.xlu0 %v32, 112
    %v120 = vpop.permute.xlu0 %119
    %121 = vrot.lane.b32.xlu0 %v33, 112
    %v122 = vpop.permute.xlu0 %121
    %v128 = vsel %vm34, %v62, 0
    %v131 = vsel %vm34, %v63, 0
    %v134 = vsel %vm34, %v97, 0
    %v137 = vsel %vm34, %v98, 0
    %139 = vmatprep.subr.mxu0 0.0
    %140 = vmatpush1.msra.mxu0 0.0
    %141 = vmatprep.subr.mxu0 0.0
    %142 = vmatpush1.msra.mxu0 0.0
    %143 = vmatprep.subr.mxu0 0.0
    %144 = vmatpush1.msra.mxu0 0.0
    %145 = vmatprep.subr.mxu0 0.0
    %146 = vmatpush1.msra.mxu0 0.0
    %147 = vmatprep.subr.mxu0 0.0
    %148 = vmatpush1.msra.mxu0 0.0
    %149 = vmatprep.subr.mxu0 0.0
    %150 = vmatpush1.msra.mxu0 0.0
    %151 = vmatprep.subr.mxu0 0.0
    %152 = vmatpush1.msra.mxu0 0.0
    %153 = vmatprep.subr.mxu0 0.0
    %154 = vmatpush1.msra.mxu0 0.0
    %155 = vmatprep.subr.mxu0 0.0
    %156 = vmatpush1.msra.mxu0 0.0
    %157 = vmatprep.subr.mxu0 0.0
    %158 = vmatpush1.msra.mxu0 0.0
    %159 = vmatprep.subr.mxu0 0.0
    %160 = vmatpush1.msra.mxu0 0.0
    %161 = vmatprep.subr.mxu0 0.0
    %162 = vmatpush1.msra.mxu0 0.0
    %163 = vmatprep.subr.mxu0 0.0
    %164 = vmatpush1.msra.mxu0 0.0
    %165 = vmatprep.subr.mxu0 0.0
    %166 = vmatpush1.msra.mxu0 0.0
    %167 = vmatprep.subr.mxu0 0.0
    %168 = vmatpush1.msra.mxu0 %v110
    %169 = vmatprep.subr.mxu0 0.0
    %170 = vmatpush1.msra.mxu0 %v109
    %171 = vmatprep.subr.mxu0 0.0
    %172 = vmatpush2.msra.mxu0 0.0
    %173 = vmatprep.subr.mxu0 0.0
    %174 = vmatpush2.msra.mxu0 0.0
    %175 = vmatprep.subr.mxu0 0.0
    %176 = vmatpush2.msra.mxu0 0.0
    %177 = vmatprep.subr.mxu0 0.0
    %178 = vmatpush2.msra.mxu0 0.0
    %179 = vmatprep.subr.mxu0 0.0
    %180 = vmatpush2.msra.mxu0 0.0
    %181 = vmatprep.subr.mxu0 0.0
    %182 = vmatpush2.msra.mxu0 0.0
    %183 = vmatprep.subr.mxu0 0.0
    %184 = vmatpush2.msra.mxu0 0.0
    %185 = vmatprep.subr.mxu0 0.0
    %186 = vmatpush2.msra.mxu0 0.0
    %187 = vmatprep.subr.mxu0 0.0
    %188 = vmatpush2.msra.mxu0 0.0
    %189 = vmatprep.subr.mxu0 0.0
    %190 = vmatpush2.msra.mxu0 0.0
    %191 = vmatprep.subr.mxu0 0.0
    %192 = vmatpush2.msra.mxu0 0.0
    %193 = vmatprep.subr.mxu0 0.0
    %194 = vmatpush2.msra.mxu0 0.0
    %195 = vmatprep.subr.mxu0 0.0
    %196 = vmatpush2.msra.mxu0 0.0
    %197 = vmatprep.subr.mxu0 0.0
    %198 = vmatpush2.msra.mxu0 0.0
    %199 = vmatprep.subr.mxu0 0.0
    %200 = vmatpush2.msra.mxu0 0.0
    %201 = vmatprep.subr.mxu0 0.0
    %202 = vmatpush2.msra.mxu0 0.0
    %203 = vmatprep.mubr.f32.mxu0 0.0
    %204 = vmatmul.mubr.f32.gmra.mxu0 %v128
    %v205 = vpop.f32.mrf.mxu0
    %v206 = vadd.f32 %v116, %v205
    %v207 = vpop.f32.mrf.mxu0
    %208 = vmatprep.mubr.f32.mxu0 0.0
    %209 = vmatmul.mubr.f32.gmra.mxu0 %v131
    %v210 = vpop.f32.mrf.mxu0
    %v211 = vadd.f32 %v118, %v210
    %v212 = vpop.f32.mrf.mxu0
    %213 = vmatprep.mubr.f32.mxu0 0.0
    %214 = vmatmul.mubr.f32.gmra.mxu0 %v134
    %v215 = vpop.f32.mrf.mxu0
    %v216 = vadd.f32 %v120, %v215
    %v217 = vpop.f32.mrf.mxu0
    %218 = vmatprep.mubr.f32.mxu0 0.0
    %219 = vmatmul.mubr.f32.gmra.mxu0 %v137
    %v220 = vpop.f32.mrf.mxu0
    %v221 = vadd.f32 %v122, %v220
    %v222 = vpop.f32.mrf.mxu0
    %223 = vdwg.mxu0
    %v224 = vld [vmem:[%s1 + $0x10] sm:$0xff]
    %v225 = vld [vmem:[%s1 + $0x18] sm:$0xff]
    %v226 = vld [vmem:[%s1 + $0x20] sm:$0xff]
    %v227 = vld [vmem:[%s1 + $0x28] sm:$0xff]
    %v228 = vlaneseq
    %v229 = vshrl.u32 %v228, 7
    %v230 = vsub.s32 0, %v229
    %v231 = vrot.slane %v106, %v230
    %vm232 = vcmask 261120
    %v234 = vsel %vm232, %v206, 0
    %v237 = vsel %vm232, %v211, 0
    %v240 = vsel %vm232, %v216, 0
    %v243 = vsel %vm232, %v221, 0
    %245 = vmatprep.subr.mxu0 0.0
    %246 = vmatpush1.msra.mxu0 0.0
    %247 = vmatprep.subr.mxu0 0.0
    %248 = vmatpush1.msra.mxu0 0.0
    %249 = vmatprep.subr.mxu0 0.0
    %250 = vmatpush1.msra.mxu0 0.0
    %251 = vmatprep.subr.mxu0 0.0
    %252 = vmatpush1.msra.mxu0 0.0
    %253 = vmatprep.subr.mxu0 0.0
    %254 = vmatpush1.msra.mxu0 0.0
    %255 = vmatprep.subr.mxu0 0.0
    %256 = vmatpush1.msra.mxu0 0.0
    %257 = vmatprep.subr.mxu0 0.0
    %258 = vmatpush1.msra.mxu0 0.0
    %259 = vmatprep.subr.mxu0 0.0
    %260 = vmatpush1.msra.mxu0 0.0
    %261 = vmatprep.subr.mxu0 0.0
    %262 = vmatpush1.msra.mxu0 0.0
    %263 = vmatprep.subr.mxu0 0.0
    %264 = vmatpush1.msra.mxu0 0.0
    %265 = vmatprep.subr.mxu0 0.0
    %266 = vmatpush1.msra.mxu0 0.0
    %267 = vmatprep.subr.mxu0 0.0
    %268 = vmatpush1.msra.mxu0 0.0
    %269 = vmatprep.subr.mxu0 0.0
    %270 = vmatpush1.msra.mxu0 %v227
    %271 = vmatprep.subr.mxu0 0.0
    %272 = vmatpush1.msra.mxu0 %v226
    %273 = vmatprep.subr.mxu0 0.0
    %274 = vmatpush1.msra.mxu0 %v225
    %275 = vmatprep.subr.mxu0 0.0
    %276 = vmatpush1.msra.mxu0 %v224
    %277 = vmatprep.subr.mxu0 0.0
    %278 = vmatpush2.msra.mxu0 0.0
    %279 = vmatprep.subr.mxu0 0.0
    %280 = vmatpush2.msra.mxu0 0.0
    %281 = vmatprep.subr.mxu0 0.0
    %282 = vmatpush2.msra.mxu0 0.0
    %283 = vmatprep.subr.mxu0 0.0
    %284 = vmatpush2.msra.mxu0 0.0
    %285 = vmatprep.subr.mxu0 0.0
    %286 = vmatpush2.msra.mxu0 0.0
    %287 = vmatprep.subr.mxu0 0.0
    %288 = vmatpush2.msra.mxu0 0.0
    %289 = vmatprep.subr.mxu0 0.0
    %290 = vmatpush2.msra.mxu0 0.0
    %291 = vmatprep.subr.mxu0 0.0
    %292 = vmatpush2.msra.mxu0 0.0
    %293 = vmatprep.subr.mxu0 0.0
    %294 = vmatpush2.msra.mxu0 0.0
    %295 = vmatprep.subr.mxu0 0.0
    %296 = vmatpush2.msra.mxu0 0.0
    %297 = vmatprep.subr.mxu0 0.0
    %298 = vmatpush2.msra.mxu0 0.0
    %299 = vmatprep.subr.mxu0 0.0
    %300 = vmatpush2.msra.mxu0 0.0
    %301 = vmatprep.subr.mxu0 0.0
    %302 = vmatpush2.msra.mxu0 0.0
    %303 = vmatprep.subr.mxu0 0.0
    %304 = vmatpush2.msra.mxu0 0.0
    %305 = vmatprep.subr.mxu0 0.0
    %306 = vmatpush2.msra.mxu0 0.0
    %307 = vmatprep.subr.mxu0 0.0
    %308 = vmatpush2.msra.mxu0 0.0
    %309 = vmatprep.mubr.f32.mxu0 0.0
    %310 = vmatmul.mubr.f32.gmra.mxu0 %v234
    %v311 = vpop.f32.mrf.mxu0
    %v312 = vadd.f32 %v231, %v311
    %v313 = vpop.f32.mrf.mxu0
    %314 = vmatprep.mubr.f32.mxu0 0.0
    %315 = vmatmul.mubr.f32.gmra.mxu0 %v237
    %v316 = vpop.f32.mrf.mxu0
    %v317 = vadd.f32 %v231, %v316
    %v318 = vpop.f32.mrf.mxu0
    %319 = vmatprep.mubr.f32.mxu0 0.0
    %320 = vmatmul.mubr.f32.gmra.mxu0 %v240
    %v321 = vpop.f32.mrf.mxu0
    %v322 = vadd.f32 %v231, %v321
    %v323 = vpop.f32.mrf.mxu0
    %324 = vmatprep.mubr.f32.mxu0 0.0
    %325 = vmatmul.mubr.f32.gmra.mxu0 %v243
    %v326 = vpop.f32.mrf.mxu0
    %v327 = vadd.f32 %v231, %v326
    %v328 = vpop.f32.mrf.mxu0
    %329 = vdwg.mxu0
    %v330 = vmul.f32 %v312, %v312
    %v331 = vmul.f32 %v317, %v317
    %v332 = vmul.f32 %v322, %v322
    %v333 = vmul.f32 %v327, %v327
    %v334 = vmul.f32 %v312, %v330
    %v335 = vmul.f32 %v317, %v331
    %v336 = vmul.f32 %v322, %v332
    %v337 = vmul.f32 %v327, %v333
    %v338 = vmul.f32 %v334, 0.044715
    %v339 = vmul.f32 %v335, 0.044715
    %v340 = vmul.f32 %v336, 0.044715
    %v341 = vmul.f32 %v337, 0.044715
    %v342 = vadd.f32 %v312, %v338
    %v343 = vadd.f32 %v317, %v339
    %v344 = vadd.f32 %v322, %v340
    %v345 = vadd.f32 %v327, %v341
    %v346 = vmul.f32 %v342, 0.7978846
    %v347 = vmul.f32 %v343, 0.7978846
    %v348 = vmul.f32 %v344, 0.7978846
    %v349 = vmul.f32 %v345, 0.7978846
    %v350 = vtanh.pop %v346
    %v351 = vtanh.pop %v347
    %v352 = vtanh.pop %v348
    %v353 = vtanh.pop %v349
    %v354 = vadd.f32 %v350, 1.0
    %v355 = vadd.f32 %v351, 1.0
    %v356 = vadd.f32 %v352, 1.0
    %v357 = vadd.f32 %v353, 1.0
    %v358 = vmul.f32 %v354, 0.5
    %v359 = vmul.f32 %v355, 0.5
    %v360 = vmul.f32 %v356, 0.5
    %v361 = vmul.f32 %v357, 0.5
    %v362 = vmul.f32 %v312, %v358
    %v363 = vmul.f32 %v317, %v359
    %v364 = vmul.f32 %v322, %v360
    %v365 = vmul.f32 %v327, %v361
    %v366 = vmax.f32 %v312, 0.0
    %v367 = vmax.f32 %v317, 0.0
    %v368 = vmax.f32 %v322, 0.0
    %v369 = vmax.f32 %v327, 0.0
    %v370 = vsel %vm232, %v362, %v366
    %v371 = vsel %vm232, %v363, %v367
    %v372 = vsel %vm232, %v364, %v368
    %v373 = vsel %vm232, %v365, %v369
    %v374 = vld [vmem:[%s1 + $0x30] sm:$0xff]
    %v375 = vld [vmem:[%s1 + $0x38] sm:$0xff]
    %v376 = vld [vmem:[%s1 + $0x40] sm:$0xff]
    %v377 = vld [vmem:[%s1 + $0x48] sm:$0xff]
    %v378 = vld [vmem:[%s1 + $0x50] sm:$0xff]
    %v379 = vld [vmem:[%s1 + $0x58] sm:$0xff]
    %v380 = vld [vmem:[%s1 + $0x60] sm:$0xff]
    %v381 = vld [vmem:[%s1 + $0x68] sm:$0xff]
    %v382 = vlaneseq
    %v383 = vshrl.u32 %v382, 7
    %v384 = vsub.s32 1, %v383
    %v385 = vrot.slane %v106, %v384
    %vm386 = vcmask 523264
    %v388 = vsel %vm386, %v370, 0
    %v391 = vsel %vm386, %v371, 0
    %v394 = vsel %vm386, %v372, 0
    %v397 = vsel %vm386, %v373, 0
    %399 = vmatprep.subr.mxu0 0.0
    %400 = vmatpush1.msra.mxu0 0.0
    %401 = vmatprep.subr.mxu0 0.0
    %402 = vmatpush1.msra.mxu0 0.0
    %403 = vmatprep.subr.mxu0 0.0
    %404 = vmatpush1.msra.mxu0 0.0
    %405 = vmatprep.subr.mxu0 0.0
    %406 = vmatpush1.msra.mxu0 0.0
    %407 = vmatprep.subr.mxu0 0.0
    %408 = vmatpush1.msra.mxu0 0.0
    %409 = vmatprep.subr.mxu0 0.0
    %410 = vmatpush1.msra.mxu0 0.0
    %411 = vmatprep.subr.mxu0 0.0
    %412 = vmatpush1.msra.mxu0 0.0
    %413 = vmatprep.subr.mxu0 0.0
    %414 = vmatpush1.msra.mxu0 0.0
    %415 = vmatprep.subr.mxu0 0.0
    %416 = vmatpush1.msra.mxu0 %v381
    %417 = vmatprep.subr.mxu0 0.0
    %418 = vmatpush1.msra.mxu0 %v380
    %419 = vmatprep.subr.mxu0 0.0
    %420 = vmatpush1.msra.mxu0 %v379
    %421 = vmatprep.subr.mxu0 0.0
    %422 = vmatpush1.msra.mxu0 %v378
    %423 = vmatprep.subr.mxu0 0.0
    %424 = vmatpush1.msra.mxu0 %v377
    %425 = vmatprep.subr.mxu0 0.0
    %426 = vmatpush1.msra.mxu0 %v376
    %427 = vmatprep.subr.mxu0 0.0
    %428 = vmatpush1.msra.mxu0 %v375
    %429 = vmatprep.subr.mxu0 0.0
    %430 = vmatpush1.msra.mxu0 %v374
    %431 = vmatprep.subr.mxu0 0.0
    %432 = vmatpush2.msra.mxu0 0.0
    %433 = vmatprep.subr.mxu0 0.0
    %434 = vmatpush2.msra.mxu0 0.0
    %435 = vmatprep.subr.mxu0 0.0
    %436 = vmatpush2.msra.mxu0 0.0
    %437 = vmatprep.subr.mxu0 0.0
    %438 = vmatpush2.msra.mxu0 0.0
    %439 = vmatprep.subr.mxu0 0.0
    %440 = vmatpush2.msra.mxu0 0.0
    %441 = vmatprep.subr.mxu0 0.0
    %442 = vmatpush2.msra.mxu0 0.0
    %443 = vmatprep.subr.mxu0 0.0
    %444 = vmatpush2.msra.mxu0 0.0
    %445 = vmatprep.subr.mxu0 0.0
    %446 = vmatpush2.msra.mxu0 0.0
    %447 = vmatprep.subr.mxu0 0.0
    %448 = vmatpush2.msra.mxu0 0.0
    %449 = vmatprep.subr.mxu0 0.0
    %450 = vmatpush2.msra.mxu0 0.0
    %451 = vmatprep.subr.mxu0 0.0
    %452 = vmatpush2.msra.mxu0 0.0
    %453 = vmatprep.subr.mxu0 0.0
    %454 = vmatpush2.msra.mxu0 0.0
    %455 = vmatprep.subr.mxu0 0.0
    %456 = vmatpush2.msra.mxu0 0.0
    %457 = vmatprep.subr.mxu0 0.0
    %458 = vmatpush2.msra.mxu0 0.0
    %459 = vmatprep.subr.mxu0 0.0
    %460 = vmatpush2.msra.mxu0 0.0
    %461 = vmatprep.subr.mxu0 0.0
    %462 = vmatpush2.msra.mxu0 0.0
    %463 = vmatprep.mubr.f32.mxu0 0.0
    %464 = vmatmul.mubr.f32.gmra.mxu0 %v388
    %v465 = vpop.f32.mrf.mxu0
    %v466 = vadd.f32 %v385, %v465
    %v467 = vpop.f32.mrf.mxu0
    %468 = vmatprep.mubr.f32.mxu0 0.0
    %469 = vmatmul.mubr.f32.gmra.mxu0 %v391
    %v470 = vpop.f32.mrf.mxu0
    %v471 = vadd.f32 %v385, %v470
    %v472 = vpop.f32.mrf.mxu0
    %473 = vmatprep.mubr.f32.mxu0 0.0
    %474 = vmatmul.mubr.f32.gmra.mxu0 %v394
    %v475 = vpop.f32.mrf.mxu0
    %v476 = vadd.f32 %v385, %v475
    %v477 = vpop.f32.mrf.mxu0
    %478 = vmatprep.mubr.f32.mxu0 0.0
    %479 = vmatmul.mubr.f32.gmra.mxu0 %v397
    %v480 = vpop.f32.mrf.mxu0
    %v481 = vadd.f32 %v385, %v480
    %v482 = vpop.f32.mrf.mxu0
    %483 = vdwg.mxu0
    %v484 = vxor.u32 %v466, 2147483648
    %v485 = vxor.u32 %v471, 2147483648
    %v486 = vxor.u32 %v476, 2147483648
    %v487 = vxor.u32 %v481, 2147483648
    %v488 = vmul.f32 %v484, 1.442695
    %v489 = vpow.pop %v488
    %v490 = vmul.f32 %v485, 1.442695
    %v491 = vpow.pop %v490
    %v492 = vmul.f32 %v486, 1.442695
    %v493 = vpow.pop %v492
    %v494 = vmul.f32 %v487, 1.442695
    %v495 = vpow.pop %v494
    %v496 = vadd.f32 %v489, 1.0
    %v497 = vadd.f32 %v491, 1.0
    %v498 = vadd.f32 %v493, 1.0
    %v499 = vadd.f32 %v495, 1.0
    %v500 = vrcp.pop %v496
    %v501 = vmul.f32 1.0, %v500
    %v502 = vrcp.pop %v497
    %v503 = vmul.f32 1.0, %v502
    %v504 = vrcp.pop %v498
    %v505 = vmul.f32 1.0, %v504
    %v506 = vrcp.pop %v499
    %v507 = vmul.f32 1.0, %v506
    %v508 = vlaneseq
    %v509 = vshrl.u32 %v508, 7
    %v510 = vsub.s32 2, %v509
    %v511 = vrot.slane %v106, %v510
    %v512 = vmul.f32 %v370, %v511
    %v513 = vmul.f32 %v371, %v511
    %v514 = vmul.f32 %v372, %v511
    %v515 = vmul.f32 %v373, %v511
    %v516 = vsel %vm386, %v512, 0.0
    %517 = vadd.xlane.f32.xlu0 %v516
    %v518 = vpop.xlane.xlu0 %517
    %v519 = vsel %vm386, %v513, 0.0
    %520 = vadd.xlane.f32.xlu0 %v519
    %v521 = vpop.xlane.xlu0 %520
    %v522 = vsel %vm386, %v514, 0.0
    %523 = vadd.xlane.f32.xlu0 %v522
    %v524 = vpop.xlane.xlu0 %523
    %v525 = vsel %vm386, %v515, 0.0
    %526 = vadd.xlane.f32.xlu0 %v525
    %v527 = vpop.xlane.xlu0 %526
    %s528 = sld [smem:[#allocation2]]
    %v529 = vstv %s528
    %v530 = vadd.f32 %v518, %v529
    %v531 = vadd.f32 %v521, %v529
    %v532 = vadd.f32 %v524, %v529
    %v533 = vadd.f32 %v527, %v529
    %v534 = vxor.u32 %v530, 2147483648
    %v535 = vxor.u32 %v531, 2147483648
    %v536 = vxor.u32 %v532, 2147483648
    %v537 = vxor.u32 %v533, 2147483648
    %v538 = vmul.f32 %v534, 1.442695
    %v539 = vpow.pop %v538
    %v540 = vmul.f32 %v535, 1.442695
    %v541 = vpow.pop %v540
    %v542 = vmul.f32 %v536, 1.442695
    %v543 = vpow.pop %v542
    %v544 = vmul.f32 %v537, 1.442695
    %v545 = vpow.pop %v544
    %v546 = vadd.f32 %v539, 1.0
    %v547 = vadd.f32 %v541, 1.0
    %v548 = vadd.f32 %v543, 1.0
    %v549 = vadd.f32 %v545, 1.0
    %v550 = vrcp.pop %v546
    %v551 = vmul.f32 1.0, %v550
    %v552 = vrcp.pop %v547
    %v553 = vmul.f32 1.0, %v552
    %v554 = vrcp.pop %v548
    %v555 = vmul.f32 1.0, %v554
    %v556 = vrcp.pop %v549
    %v557 = vmul.f32 1.0, %v556
    %v558 = vmul.f32 %v501, %v362
    %v559 = vmul.f32 %v503, %v363
    %v560 = vmul.f32 %v505, %v364
    %v561 = vmul.f32 %v507, %v365
    %v562 = vsub.f32 1.0, %v501
    %v563 = vsub.f32 1.0, %v503
    %v564 = vsub.f32 1.0, %v505
    %v565 = vsub.f32 1.0, %v507
    %570 = vrot.lane.b32.xlu0 %v366, 96
    %v571 = vpop.permute.xlu0 %570
    %572 = vrot.lane.b32.xlu0 %v367, 96
    %v573 = vpop.permute.xlu0 %572
    %574 = vrot.lane.b32.xlu0 %v368, 96
    %v575 = vpop.permute.xlu0 %574
    %576 = vrot.lane.b32.xlu0 %v369, 96
    %v577 = vpop.permute.xlu0 %576
    %v582 = vmul.f32 %v562, %v571
    %v583 = vmul.f32 %v563, %v573
    %v584 = vmul.f32 %v564, %v575
    %v585 = vmul.f32 %v565, %v577
    %v586 = vadd.f32 %v558, %v582
    %v587 = vadd.f32 %v559, %v583
    %v588 = vadd.f32 %v560, %v584
    %v589 = vadd.f32 %v561, %v585
    %v590 = vadd.f32 %v362, %v571
    %v591 = vadd.f32 %v363, %v573
    %v592 = vadd.f32 %v364, %v575
    %v593 = vadd.f32 %v365, %v577
    %v594 = vmul.f32 %v590, 0.5
    %v595 = vmul.f32 %v591, 0.5
    %v596 = vmul.f32 %v592, 0.5
    %v597 = vmul.f32 %v593, 0.5
    %v598 = vadd.f32 %v586, %v594
    %v599 = vadd.f32 %v587, %v595
    %v600 = vadd.f32 %v588, %v596
    %v601 = vadd.f32 %v589, %v597
    %v602 = vmul.f32 %v598, 0.5
    %v603 = vmul.f32 %v599, 0.5
    %v604 = vmul.f32 %v600, 0.5
    %v605 = vmul.f32 %v601, 0.5
    %v606 = vld [vmem:[%s1 + $0x70] sm:$0xff]
    %v607 = vld [vmem:[%s1 + $0x78] sm:$0xff]
    %v608 = vld [vmem:[%s1 + $0x80] sm:$0xff]
    %v609 = vld [vmem:[%s1 + $0x88] sm:$0xff]
    %v610 = vlaneseq
    %v611 = vshrl.u32 %v610, 7
    %v612 = vsub.s32 3, %v611
    %v613 = vrot.slane %v106, %v612
    %v615 = vsel %vm232, %v602, 0
    %v618 = vsel %vm232, %v603, 0
    %v621 = vsel %vm232, %v604, 0
    %v624 = vsel %vm232, %v605, 0
    %626 = vmatprep.subr.mxu0 0.0
    %627 = vmatpush1.msra.mxu0 0.0
    %628 = vmatprep.subr.mxu0 0.0
    %629 = vmatpush1.msra.mxu0 0.0
    %630 = vmatprep.subr.mxu0 0.0
    %631 = vmatpush1.msra.mxu0 0.0
    %632 = vmatprep.subr.mxu0 0.0
    %633 = vmatpush1.msra.mxu0 0.0
    %634 = vmatprep.subr.mxu0 0.0
    %635 = vmatpush1.msra.mxu0 0.0
    %636 = vmatprep.subr.mxu0 0.0
    %637 = vmatpush1.msra.mxu0 0.0
    %638 = vmatprep.subr.mxu0 0.0
    %639 = vmatpush1.msra.mxu0 0.0
    %640 = vmatprep.subr.mxu0 0.0
    %641 = vmatpush1.msra.mxu0 0.0
    %642 = vmatprep.subr.mxu0 0.0
    %643 = vmatpush1.msra.mxu0 0.0
    %644 = vmatprep.subr.mxu0 0.0
    %645 = vmatpush1.msra.mxu0 0.0
    %646 = vmatprep.subr.mxu0 0.0
    %647 = vmatpush1.msra.mxu0 0.0
    %648 = vmatprep.subr.mxu0 0.0
    %649 = vmatpush1.msra.mxu0 0.0
    %650 = vmatprep.subr.mxu0 0.0
    %651 = vmatpush1.msra.mxu0 %v609
    %652 = vmatprep.subr.mxu0 0.0
    %653 = vmatpush1.msra.mxu0 %v608
    %654 = vmatprep.subr.mxu0 0.0
    %655 = vmatpush1.msra.mxu0 %v607
    %656 = vmatprep.subr.mxu0 0.0
    %657 = vmatpush1.msra.mxu0 %v606
    %658 = vmatprep.subr.mxu0 0.0
    %659 = vmatpush2.msra.mxu0 0.0
    %660 = vmatprep.subr.mxu0 0.0
    %661 = vmatpush2.msra.mxu0 0.0
    %662 = vmatprep.subr.mxu0 0.0
    %663 = vmatpush2.msra.mxu0 0.0
    %664 = vmatprep.subr.mxu0 0.0
    %665 = vmatpush2.msra.mxu0 0.0
    %666 = vmatprep.subr.mxu0 0.0
    %667 = vmatpush2.msra.mxu0 0.0
    %668 = vmatprep.subr.mxu0 0.0
    %669 = vmatpush2.msra.mxu0 0.0
    %670 = vmatprep.subr.mxu0 0.0
    %671 = vmatpush2.msra.mxu0 0.0
    %672 = vmatprep.subr.mxu0 0.0
    %673 = vmatpush2.msra.mxu0 0.0
    %674 = vmatprep.subr.mxu0 0.0
    %675 = vmatpush2.msra.mxu0 0.0
    %676 = vmatprep.subr.mxu0 0.0
    %677 = vmatpush2.msra.mxu0 0.0
    %678 = vmatprep.subr.mxu0 0.0
    %679 = vmatpush2.msra.mxu0 0.0
    %680 = vmatprep.subr.mxu0 0.0
    %681 = vmatpush2.msra.mxu0 0.0
    %682 = vmatprep.subr.mxu0 0.0
    %683 = vmatpush2.msra.mxu0 0.0
    %684 = vmatprep.subr.mxu0 0.0
    %685 = vmatpush2.msra.mxu0 0.0
    %686 = vmatprep.subr.mxu0 0.0
    %687 = vmatpush2.msra.mxu0 0.0
    %688 = vmatprep.subr.mxu0 0.0
    %689 = vmatpush2.msra.mxu0 0.0
    %690 = vmatprep.mubr.f32.mxu0 0.0
    %691 = vmatmul.mubr.f32.gmra.mxu0 %v615
    %v692 = vpop.f32.mrf.mxu0
    %v693 = vadd.f32 %v613, %v692
    %v694 = vpop.f32.mrf.mxu0
    %695 = vmatprep.mubr.f32.mxu0 0.0
    %696 = vmatmul.mubr.f32.gmra.mxu0 %v618
    %v697 = vpop.f32.mrf.mxu0
    %v698 = vadd.f32 %v613, %v697
    %v699 = vpop.f32.mrf.mxu0
    %700 = vmatprep.mubr.f32.mxu0 0.0
    %701 = vmatmul.mubr.f32.gmra.mxu0 %v621
    %v702 = vpop.f32.mrf.mxu0
    %v703 = vadd.f32 %v613, %v702
    %v704 = vpop.f32.mrf.mxu0
    %705 = vmatprep.mubr.f32.mxu0 0.0
    %706 = vmatmul.mubr.f32.gmra.mxu0 %v624
    %v707 = vpop.f32.mrf.mxu0
    %v708 = vadd.f32 %v613, %v707
    %v709 = vpop.f32.mrf.mxu0
    %710 = vdwg.mxu0
    %v711 = vsel %vm232, %v693, 0.0
    %712 = vadd.xlane.f32.xlu0 %v711
    %v713 = vpop.xlane.xlu0 %712
    %v714 = vsel %vm232, %v698, 0.0
    %715 = vadd.xlane.f32.xlu0 %v714
    %v716 = vpop.xlane.xlu0 %715
    %v717 = vsel %vm232, %v703, 0.0
    %718 = vadd.xlane.f32.xlu0 %v717
    %v719 = vpop.xlane.xlu0 %718
    %v720 = vsel %vm232, %v708, 0.0
    %721 = vadd.xlane.f32.xlu0 %v720
    %v722 = vpop.xlane.xlu0 %721
    %v723 = vrcp.pop 32.0
    %v724 = vmul.f32 %v713, %v723
    %v725 = vmul.f32 %v716, %v723
    %v726 = vmul.f32 %v719, %v723
    %v727 = vmul.f32 %v722, %v723
    %v728 = vsub.f32 %v693, %v724
    %v729 = vsub.f32 %v698, %v725
    %v730 = vsub.f32 %v703, %v726
    %v731 = vsub.f32 %v708, %v727
    %v732 = vmul.f32 %v728, %v728
    %v733 = vmul.f32 %v729, %v729
    %v734 = vmul.f32 %v730, %v730
    %v735 = vmul.f32 %v731, %v731
    %v736 = vsel %vm232, %v732, 0.0
    %737 = vadd.xlane.f32.xlu0 %v736
    %v738 = vpop.xlane.xlu0 %737
    %v739 = vsel %vm232, %v733, 0.0
    %740 = vadd.xlane.f32.xlu0 %v739
    %v741 = vpop.xlane.xlu0 %740
    %v742 = vsel %vm232, %v734, 0.0
    %743 = vadd.xlane.f32.xlu0 %v742
    %v744 = vpop.xlane.xlu0 %743
    %v745 = vsel %vm232, %v735, 0.0
    %746 = vadd.xlane.f32.xlu0 %v745
    %v747 = vpop.xlane.xlu0 %746
    %v748 = vmul.f32 %v738, %v723
    %v749 = vmul.f32 %v741, %v723
    %v750 = vmul.f32 %v744, %v723
    %v751 = vmul.f32 %v747, %v723
    %v752 = vadd.f32 %v748, 1e-05
    %v753 = vadd.f32 %v749, 1e-05
    %v754 = vadd.f32 %v750, 1e-05
    %v755 = vadd.f32 %v751, 1e-05
    %v756 = vrsqrt.pop %v752
    %v757 = vrsqrt.pop %v753
    %v758 = vrsqrt.pop %v754
    %v759 = vrsqrt.pop %v755
    %v760 = vmul.f32 %v728, %v756
    %v761 = vmul.f32 %v729, %v757
    %v762 = vmul.f32 %v730, %v758
    %v763 = vmul.f32 %v731, %v759
    %v764 = vlaneseq
    %v765 = vshrl.u32 %v764, 7
    %v766 = vsub.s32 4, %v765
    %v767 = vrot.slane %v106, %v766
    %v768 = vmul.f32 %v760, %v767
    %v769 = vmul.f32 %v761, %v767
    %v770 = vmul.f32 %v762, %v767
    %v771 = vmul.f32 %v763, %v767
    %v772 = vlaneseq
    %v773 = vshrl.u32 %v772, 7
    %v774 = vsub.s32 5, %v773
    %v775 = vrot.slane %v106, %v774
    %v776 = vadd.f32 %v768, %v775
    %v777 = vadd.f32 %v769, %v775
    %v778 = vadd.f32 %v770, %v775
    %v779 = vadd.f32 %v771, %v775
    %v780 = vmax.f32 %v776, 0.0
    %v781 = vmax.f32 %v777, 0.0
    %v782 = vmax.f32 %v778, 0.0
    %v783 = vmax.f32 %v779, 0.0
    %v784 = vmul.f32 %v206, 2.0
    %v785 = vmul.f32 %v211, 2.0
    %v786 = vmul.f32 %v216, 2.0
    %v787 = vmul.f32 %v221, 2.0
    %v788 = vadd.f32 %v780, %v784
    %v789 = vadd.f32 %v781, %v785
    %v790 = vadd.f32 %v782, %v786
    %v791 = vadd.f32 %v783, %v787
    %v792 = vsel %vm232, %v788, 0.0
    %793 = vadd.xlane.f32.xlu0 %v792
    %v794 = vpop.xlane.xlu0 %793
    %v795 = vsel %vm232, %v789, 0.0
    %796 = vadd.xlane.f32.xlu0 %v795
    %v797 = vpop.xlane.xlu0 %796
    %v798 = vsel %vm232, %v790, 0.0
    %799 = vadd.xlane.f32.xlu0 %v798
    %v800 = vpop.xlane.xlu0 %799
    %v801 = vsel %vm232, %v791, 0.0
    %802 = vadd.xlane.f32.xlu0 %v801
    %v803 = vpop.xlane.xlu0 %802
    %v804 = vmul.f32 %v794, %v723
    %v805 = vmul.f32 %v797, %v723
    %v806 = vmul.f32 %v800, %v723
    %v807 = vmul.f32 %v803, %v723
    %v808 = vsub.f32 %v788, %v804
    %v809 = vsub.f32 %v789, %v805
    %v810 = vsub.f32 %v790, %v806
    %v811 = vsub.f32 %v791, %v807
    %v812 = vmul.f32 %v808, %v808
    %v813 = vmul.f32 %v809, %v809
    %v814 = vmul.f32 %v810, %v810
    %v815 = vmul.f32 %v811, %v811
    %v816 = vsel %vm232, %v812, 0.0
    %817 = vadd.xlane.f32.xlu0 %v816
    %v818 = vpop.xlane.xlu0 %817
    %v819 = vsel %vm232, %v813, 0.0
    %820 = vadd.xlane.f32.xlu0 %v819
    %v821 = vpop.xlane.xlu0 %820
    %v822 = vsel %vm232, %v814, 0.0
    %823 = vadd.xlane.f32.xlu0 %v822
    %v824 = vpop.xlane.xlu0 %823
    %v825 = vsel %vm232, %v815, 0.0
    %826 = vadd.xlane.f32.xlu0 %v825
    %v827 = vpop.xlane.xlu0 %826
    %v828 = vmul.f32 %v818, %v723
    %v829 = vmul.f32 %v821, %v723
    %v830 = vmul.f32 %v824, %v723
    %v831 = vmul.f32 %v827, %v723
    %v832 = vadd.f32 %v828, 1e-05
    %v833 = vadd.f32 %v829, 1e-05
    %v834 = vadd.f32 %v830, 1e-05
    %v835 = vadd.f32 %v831, 1e-05
    %v836 = vrsqrt.pop %v832
    %v837 = vrsqrt.pop %v833
    %v838 = vrsqrt.pop %v834
    %v839 = vrsqrt.pop %v835
    %v840 = vmul.f32 %v808, %v836
    %v841 = vmul.f32 %v809, %v837
    %v842 = vmul.f32 %v810, %v838
    %v843 = vmul.f32 %v811, %v839
    %v844 = vlaneseq
    %v845 = vshrl.u32 %v844, 7
    %v846 = vsub.s32 6, %v845
    %v847 = vrot.slane %v106, %v846
    %v848 = vmul.f32 %v840, %v847
    %v849 = vmul.f32 %v841, %v847
    %v850 = vmul.f32 %v842, %v847
    %v851 = vmul.f32 %v843, %v847
    %v852 = vlaneseq
    %v853 = vshrl.u32 %v852, 7
    %v854 = vsub.s32 7, %v853
    %v855 = vrot.slane %v106, %v854
    %v856 = vadd.f32 %v848, %v855
    %v857 = vadd.f32 %v849, %v855
    %v858 = vadd.f32 %v850, %v855
    %v859 = vadd.f32 %v851, %v855
    %v860 = vld [vmem:[%s1 + $0x90] sm:$0xff]
    %v861 = vld [vmem:[%s1 + $0x98] sm:$0xff]
    %v862 = vld [vmem:[%s1 + $0xa0] sm:$0xff]
    %v863 = vld [vmem:[%s1 + $0xa8] sm:$0xff]
    %s864 = sld [smem:[#allocation2 + $0x2]]
    %v865 = vstv %s864
    %v866 = vmul.f32 %v551, %v865
    %v867 = vmul.f32 %v553, %v865
    %v868 = vmul.f32 %v555, %v865
    %v869 = vmul.f32 %v557, %v865
    %v870 = vadd.f32 %v866, 0.0
    %v871 = vadd.f32 %v867, 0.0
    %v872 = vadd.f32 %v868, 0.0
    %v873 = vadd.f32 %v869, 0.0
    %v874 = vld [vmem:[%s1 + $0xb0] sm:$0xff]
    %v875 = vld [vmem:[%s1 + $0xb8] sm:$0xff]
    %v876 = vld [vmem:[%s1 + $0xc0] sm:$0xff]
    %v877 = vld [vmem:[%s1 + $0xc8] sm:$0xff]
    %v878 = vlaneseq
    %v879 = vshrl.u32 %v878, 7
    %v880 = vsub.s32 0, %v879
    %v881 = vrot.slane %v107, %v880
    %v883 = vsel %vm232, %v856, 0
    %v886 = vsel %vm232, %v857, 0
    %v889 = vsel %vm232, %v858, 0
    %v892 = vsel %vm232, %v859, 0
    %894 = vmatprep.subr.mxu0 0.0
    %895 = vmatpush1.msra.mxu0 0.0
    %896 = vmatprep.subr.mxu0 0.0
    %897 = vmatpush1.msra.mxu0 0.0
    %898 = vmatprep.subr.mxu0 0.0
    %899 = vmatpush1.msra.mxu0 0.0
    %900 = vmatprep.subr.mxu0 0.0
    %901 = vmatpush1.msra.mxu0 0.0
    %902 = vmatprep.subr.mxu0 0.0
    %903 = vmatpush1.msra.mxu0 0.0
    %904 = vmatprep.subr.mxu0 0.0
    %905 = vmatpush1.msra.mxu0 0.0
    %906 = vmatprep.subr.mxu0 0.0
    %907 = vmatpush1.msra.mxu0 0.0
    %908 = vmatprep.subr.mxu0 0.0
    %909 = vmatpush1.msra.mxu0 0.0
    %910 = vmatprep.subr.mxu0 0.0
    %911 = vmatpush1.msra.mxu0 0.0
    %912 = vmatprep.subr.mxu0 0.0
    %913 = vmatpush1.msra.mxu0 0.0
    %914 = vmatprep.subr.mxu0 0.0
    %915 = vmatpush1.msra.mxu0 0.0
    %916 = vmatprep.subr.mxu0 0.0
    %917 = vmatpush1.msra.mxu0 0.0
    %918 = vmatprep.subr.mxu0 0.0
    %919 = vmatpush1.msra.mxu0 %v877
    %920 = vmatprep.subr.mxu0 0.0
    %921 = vmatpush1.msra.mxu0 %v876
    %922 = vmatprep.subr.mxu0 0.0
    %923 = vmatpush1.msra.mxu0 %v875
    %924 = vmatprep.subr.mxu0 0.0
    %925 = vmatpush1.msra.mxu0 %v874
    %926 = vmatprep.subr.mxu0 0.0
    %927 = vmatpush2.msra.mxu0 0.0
    %928 = vmatprep.subr.mxu0 0.0
    %929 = vmatpush2.msra.mxu0 0.0
    %930 = vmatprep.subr.mxu0 0.0
    %931 = vmatpush2.msra.mxu0 0.0
    %932 = vmatprep.subr.mxu0 0.0
    %933 = vmatpush2.msra.mxu0 0.0
    %934 = vmatprep.subr.mxu0 0.0
    %935 = vmatpush2.msra.mxu0 0.0
    %936 = vmatprep.subr.mxu0 0.0
    %937 = vmatpush2.msra.mxu0 0.0
    %938 = vmatprep.subr.mxu0 0.0
    %939 = vmatpush2.msra.mxu0 0.0
    %940 = vmatprep.subr.mxu0 0.0
    %941 = vmatpush2.msra.mxu0 0.0
    %942 = vmatprep.subr.mxu0 0.0
    %943 = vmatpush2.msra.mxu0 0.0
    %944 = vmatprep.subr.mxu0 0.0
    %945 = vmatpush2.msra.mxu0 0.0
    %946 = vmatprep.subr.mxu0 0.0
    %947 = vmatpush2.msra.mxu0 0.0
    %948 = vmatprep.subr.mxu0 0.0
    %949 = vmatpush2.msra.mxu0 0.0
    %950 = vmatprep.subr.mxu0 0.0
    %951 = vmatpush2.msra.mxu0 0.0
    %952 = vmatprep.subr.mxu0 0.0
    %953 = vmatpush2.msra.mxu0 0.0
    %954 = vmatprep.subr.mxu0 0.0
    %955 = vmatpush2.msra.mxu0 0.0
    %956 = vmatprep.subr.mxu0 0.0
    %957 = vmatpush2.msra.mxu0 0.0
    %958 = vmatprep.mubr.f32.mxu0 0.0
    %959 = vmatmul.mubr.f32.gmra.mxu0 %v883
    %v960 = vpop.f32.mrf.mxu0
    %v961 = vadd.f32 %v881, %v960
    %v962 = vpop.f32.mrf.mxu0
    %963 = vmatprep.mubr.f32.mxu0 0.0
    %964 = vmatmul.mubr.f32.gmra.mxu0 %v886
    %v965 = vpop.f32.mrf.mxu0
    %v966 = vadd.f32 %v881, %v965
    %v967 = vpop.f32.mrf.mxu0
    %968 = vmatprep.mubr.f32.mxu0 0.0
    %969 = vmatmul.mubr.f32.gmra.mxu0 %v889
    %v970 = vpop.f32.mrf.mxu0
    %v971 = vadd.f32 %v881, %v970
    %v972 = vpop.f32.mrf.mxu0
    %973 = vmatprep.mubr.f32.mxu0 0.0
    %974 = vmatmul.mubr.f32.gmra.mxu0 %v892
    %v975 = vpop.f32.mrf.mxu0
    %v976 = vadd.f32 %v881, %v975
    %v977 = vpop.f32.mrf.mxu0
    %978 = vdwg.mxu0
    %v979 = vmul.f32 %v961, %v961
    %v980 = vmul.f32 %v966, %v966
    %v981 = vmul.f32 %v971, %v971
    %v982 = vmul.f32 %v976, %v976
    %v983 = vmul.f32 %v961, %v979
    %v984 = vmul.f32 %v966, %v980
    %v985 = vmul.f32 %v971, %v981
    %v986 = vmul.f32 %v976, %v982
    %v987 = vmul.f32 %v983, 0.044715
    %v988 = vmul.f32 %v984, 0.044715
    %v989 = vmul.f32 %v985, 0.044715
    %v990 = vmul.f32 %v986, 0.044715
    %v991 = vadd.f32 %v961, %v987
    %v992 = vadd.f32 %v966, %v988
    %v993 = vadd.f32 %v971, %v989
    %v994 = vadd.f32 %v976, %v990
    %v995 = vmul.f32 %v991, 0.7978846
    %v996 = vmul.f32 %v992, 0.7978846
    %v997 = vmul.f32 %v993, 0.7978846
    %v998 = vmul.f32 %v994, 0.7978846
    %v999 = vtanh.pop %v995
    %v1000 = vtanh.pop %v996
    %v1001 = vtanh.pop %v997
    %v1002 = vtanh.pop %v998
    %v1003 = vadd.f32 %v999, 1.0
    %v1004 = vadd.f32 %v1000, 1.0
    %v1005 = vadd.f32 %v1001, 1.0
    %v1006 = vadd.f32 %v1002, 1.0
    %v1007 = vmul.f32 %v1003, 0.5
    %v1008 = vmul.f32 %v1004, 0.5
    %v1009 = vmul.f32 %v1005, 0.5
    %v1010 = vmul.f32 %v1006, 0.5
    %v1011 = vmul.f32 %v961, %v1007
    %v1012 = vmul.f32 %v966, %v1008
    %v1013 = vmul.f32 %v971, %v1009
    %v1014 = vmul.f32 %v976, %v1010
    %v1015 = vmax.f32 %v961, 0.0
    %v1016 = vmax.f32 %v966, 0.0
    %v1017 = vmax.f32 %v971, 0.0
    %v1018 = vmax.f32 %v976, 0.0
    %v1019 = vsel %vm232, %v1011, %v1015
    %v1020 = vsel %vm232, %v1012, %v1016
    %v1021 = vsel %vm232, %v1013, %v1017
    %v1022 = vsel %vm232, %v1014, %v1018
    %v1023 = vld [vmem:[%s1 + $0xd0] sm:$0xff]
    %v1024 = vld [vmem:[%s1 + $0xd8] sm:$0xff]
    %v1025 = vld [vmem:[%s1 + $0xe0] sm:$0xff]
    %v1026 = vld [vmem:[%s1 + $0xe8] sm:$0xff]
    %v1027 = vld [vmem:[%s1 + $0xf0] sm:$0xff]
    %v1028 = vld [vmem:[%s1 + $0xf8] sm:$0xff]
    %v1029 = vld [vmem:[%s1 + $0x100] sm:$0xff]
    %v1030 = vld [vmem:[%s1 + $0x108] sm:$0xff]
    %v1031 = vlaneseq
    %v1032 = vshrl.u32 %v1031, 7
    %v1033 = vsub.s32 1, %v1032
    %v1034 = vrot.slane %v107, %v1033
    %v1036 = vsel %vm386, %v1019, 0
    %v1039 = vsel %vm386, %v1020, 0
    %v1042 = vsel %vm386, %v1021, 0
    %v1045 = vsel %vm386, %v1022, 0
    %1047 = vmatprep.subr.mxu0 0.0
    %1048 = vmatpush1.msra.mxu0 0.0
    %1049 = vmatprep.subr.mxu0 0.0
    %1050 = vmatpush1.msra.mxu0 0.0
    %1051 = vmatprep.subr.mxu0 0.0
    %1052 = vmatpush1.msra.mxu0 0.0
    %1053 = vmatprep.subr.mxu0 0.0
    %1054 = vmatpush1.msra.mxu0 0.0
    %1055 = vmatprep.subr.mxu0 0.0
    %1056 = vmatpush1.msra.mxu0 0.0
    %1057 = vmatprep.subr.mxu0 0.0
    %1058 = vmatpush1.msra.mxu0 0.0
    %1059 = vmatprep.subr.mxu0 0.0
    %1060 = vmatpush1.msra.mxu0 0.0
    %1061 = vmatprep.subr.mxu0 0.0
    %1062 = vmatpush1.msra.mxu0 0.0
    %1063 = vmatprep.subr.mxu0 0.0
    %1064 = vmatpush1.msra.mxu0 %v1030
    %1065 = vmatprep.subr.mxu0 0.0
    %1066 = vmatpush1.msra.mxu0 %v1029
    %1067 = vmatprep.subr.mxu0 0.0
    %1068 = vmatpush1.msra.mxu0 %v1028
    %1069 = vmatprep.subr.mxu0 0.0
    %1070 = vmatpush1.msra.mxu0 %v1027
    %1071 = vmatprep.subr.mxu0 0.0
    %1072 = vmatpush1.msra.mxu0 %v1026
    %1073 = vmatprep.subr.mxu0 0.0
    %1074 = vmatpush1.msra.mxu0 %v1025
    %1075 = vmatprep.subr.mxu0 0.0
    %1076 = vmatpush1.msra.mxu0 %v1024
    %1077 = vmatprep.subr.mxu0 0.0
    %1078 = vmatpush1.msra.mxu0 %v1023
    %1079 = vmatprep.subr.mxu0 0.0
    %1080 = vmatpush2.msra.mxu0 0.0
    %1081 = vmatprep.subr.mxu0 0.0
    %1082 = vmatpush2.msra.mxu0 0.0
    %1083 = vmatprep.subr.mxu0 0.0
    %1084 = vmatpush2.msra.mxu0 0.0
    %1085 = vmatprep.subr.mxu0 0.0
    %1086 = vmatpush2.msra.mxu0 0.0
    %1087 = vmatprep.subr.mxu0 0.0
    %1088 = vmatpush2.msra.mxu0 0.0
    %1089 = vmatprep.subr.mxu0 0.0
    %1090 = vmatpush2.msra.mxu0 0.0
    %1091 = vmatprep.subr.mxu0 0.0
    %1092 = vmatpush2.msra.mxu0 0.0
    %1093 = vmatprep.subr.mxu0 0.0
    %1094 = vmatpush2.msra.mxu0 0.0
    %1095 = vmatprep.subr.mxu0 0.0
    %1096 = vmatpush2.msra.mxu0 0.0
    %1097 = vmatprep.subr.mxu0 0.0
    %1098 = vmatpush2.msra.mxu0 0.0
    %1099 = vmatprep.subr.mxu0 0.0
    %1100 = vmatpush2.msra.mxu0 0.0
    %1101 = vmatprep.subr.mxu0 0.0
    %1102 = vmatpush2.msra.mxu0 0.0
    %1103 = vmatprep.subr.mxu0 0.0
    %1104 = vmatpush2.msra.mxu0 0.0
    %1105 = vmatprep.subr.mxu0 0.0
    %1106 = vmatpush2.msra.mxu0 0.0
    %1107 = vmatprep.subr.mxu0 0.0
    %1108 = vmatpush2.msra.mxu0 0.0
    %1109 = vmatprep.subr.mxu0 0.0
    %1110 = vmatpush2.msra.mxu0 0.0
    %1111 = vmatprep.mubr.f32.mxu0 0.0
    %1112 = vmatmul.mubr.f32.gmra.mxu0 %v1036
    %v1113 = vpop.f32.mrf.mxu0
    %v1114 = vadd.f32 %v1034, %v1113
    %v1115 = vpop.f32.mrf.mxu0
    %1116 = vmatprep.mubr.f32.mxu0 0.0
    %1117 = vmatmul.mubr.f32.gmra.mxu0 %v1039
    %v1118 = vpop.f32.mrf.mxu0
    %v1119 = vadd.f32 %v1034, %v1118
    %v1120 = vpop.f32.mrf.mxu0
    %1121 = vmatprep.mubr.f32.mxu0 0.0
    %1122 = vmatmul.mubr.f32.gmra.mxu0 %v1042
    %v1123 = vpop.f32.mrf.mxu0
    %v1124 = vadd.f32 %v1034, %v1123
    %v1125 = vpop.f32.mrf.mxu0
    %1126 = vmatprep.mubr.f32.mxu0 0.0
    %1127 = vmatmul.mubr.f32.gmra.mxu0 %v1045
    %v1128 = vpop.f32.mrf.mxu0
    %v1129 = vadd.f32 %v1034, %v1128
    %v1130 = vpop.f32.mrf.mxu0
    %1131 = vdwg.mxu0
    %v1132 = vxor.u32 %v1114, 2147483648
    %v1133 = vxor.u32 %v1119, 2147483648
    %v1134 = vxor.u32 %v1124, 2147483648
    %v1135 = vxor.u32 %v1129, 2147483648
    %v1136 = vmul.f32 %v1132, 1.442695
    %v1137 = vpow.pop %v1136
    %v1138 = vmul.f32 %v1133, 1.442695
    %v1139 = vpow.pop %v1138
    %v1140 = vmul.f32 %v1134, 1.442695
    %v1141 = vpow.pop %v1140
    %v1142 = vmul.f32 %v1135, 1.442695
    %v1143 = vpow.pop %v1142
    %v1144 = vadd.f32 %v1137, 1.0
    %v1145 = vadd.f32 %v1139, 1.0
    %v1146 = vadd.f32 %v1141, 1.0
    %v1147 = vadd.f32 %v1143, 1.0
    %v1148 = vrcp.pop %v1144
    %v1149 = vmul.f32 1.0, %v1148
    %v1150 = vrcp.pop %v1145
    %v1151 = vmul.f32 1.0, %v1150
    %v1152 = vrcp.pop %v1146
    %v1153 = vmul.f32 1.0, %v1152
    %v1154 = vrcp.pop %v1147
    %v1155 = vmul.f32 1.0, %v1154
    %v1156 = vlaneseq
    %v1157 = vshrl.u32 %v1156, 7
    %v1158 = vsub.s32 2, %v1157
    %v1159 = vrot.slane %v107, %v1158
    %v1160 = vmul.f32 %v1019, %v1159
    %v1161 = vmul.f32 %v1020, %v1159
    %v1162 = vmul.f32 %v1021, %v1159
    %v1163 = vmul.f32 %v1022, %v1159
    %v1164 = vsel %vm386, %v1160, 0.0
    %1165 = vadd.xlane.f32.xlu0 %v1164
    %v1166 = vpop.xlane.xlu0 %1165
    %v1167 = vsel %vm386, %v1161, 0.0
    %1168 = vadd.xlane.f32.xlu0 %v1167
    %v1169 = vpop.xlane.xlu0 %1168
    %v1170 = vsel %vm386, %v1162, 0.0
    %1171 = vadd.xlane.f32.xlu0 %v1170
    %v1172 = vpop.xlane.xlu0 %1171
    %v1173 = vsel %vm386, %v1163, 0.0
    %1174 = vadd.xlane.f32.xlu0 %v1173
    %v1175 = vpop.xlane.xlu0 %1174
    %s1176 = sld [smem:[#allocation2 + $0x1]]
    %v1177 = vstv %s1176
    %v1178 = vadd.f32 %v1166, %v1177
    %v1179 = vadd.f32 %v1169, %v1177
    %v1180 = vadd.f32 %v1172, %v1177
    %v1181 = vadd.f32 %v1175, %v1177
    %v1182 = vxor.u32 %v1178, 2147483648
    %v1183 = vxor.u32 %v1179, 2147483648
    %v1184 = vxor.u32 %v1180, 2147483648
    %v1185 = vxor.u32 %v1181, 2147483648
    %v1186 = vmul.f32 %v1182, 1.442695
    %v1187 = vpow.pop %v1186
    %v1188 = vmul.f32 %v1183, 1.442695
    %v1189 = vpow.pop %v1188
    %v1190 = vmul.f32 %v1184, 1.442695
    %v1191 = vpow.pop %v1190
    %v1192 = vmul.f32 %v1185, 1.442695
    %v1193 = vpow.pop %v1192
    %v1194 = vadd.f32 %v1187, 1.0
    %v1195 = vadd.f32 %v1189, 1.0
    %v1196 = vadd.f32 %v1191, 1.0
    %v1197 = vadd.f32 %v1193, 1.0
    %v1198 = vrcp.pop %v1194
    %v1199 = vmul.f32 1.0, %v1198
    %v1200 = vrcp.pop %v1195
    %v1201 = vmul.f32 1.0, %v1200
    %v1202 = vrcp.pop %v1196
    %v1203 = vmul.f32 1.0, %v1202
    %v1204 = vrcp.pop %v1197
    %v1205 = vmul.f32 1.0, %v1204
    %v1206 = vmul.f32 %v1149, %v1011
    %v1207 = vmul.f32 %v1151, %v1012
    %v1208 = vmul.f32 %v1153, %v1013
    %v1209 = vmul.f32 %v1155, %v1014
    %v1210 = vsub.f32 1.0, %v1149
    %v1211 = vsub.f32 1.0, %v1151
    %v1212 = vsub.f32 1.0, %v1153
    %v1213 = vsub.f32 1.0, %v1155
    %1218 = vrot.lane.b32.xlu0 %v1015, 96
    %v1219 = vpop.permute.xlu0 %1218
    %1220 = vrot.lane.b32.xlu0 %v1016, 96
    %v1221 = vpop.permute.xlu0 %1220
    %1222 = vrot.lane.b32.xlu0 %v1017, 96
    %v1223 = vpop.permute.xlu0 %1222
    %1224 = vrot.lane.b32.xlu0 %v1018, 96
    %v1225 = vpop.permute.xlu0 %1224
    %v1230 = vmul.f32 %v1210, %v1219
    %v1231 = vmul.f32 %v1211, %v1221
    %v1232 = vmul.f32 %v1212, %v1223
    %v1233 = vmul.f32 %v1213, %v1225
    %v1234 = vadd.f32 %v1206, %v1230
    %v1235 = vadd.f32 %v1207, %v1231
    %v1236 = vadd.f32 %v1208, %v1232
    %v1237 = vadd.f32 %v1209, %v1233
    %v1238 = vadd.f32 %v1011, %v1219
    %v1239 = vadd.f32 %v1012, %v1221
    %v1240 = vadd.f32 %v1013, %v1223
    %v1241 = vadd.f32 %v1014, %v1225
    %v1242 = vmul.f32 %v1238, 0.5
    %v1243 = vmul.f32 %v1239, 0.5
    %v1244 = vmul.f32 %v1240, 0.5
    %v1245 = vmul.f32 %v1241, 0.5
    %v1246 = vadd.f32 %v1234, %v1242
    %v1247 = vadd.f32 %v1235, %v1243
    %v1248 = vadd.f32 %v1236, %v1244
    %v1249 = vadd.f32 %v1237, %v1245
    %v1250 = vmul.f32 %v1246, 0.5
    %v1251 = vmul.f32 %v1247, 0.5
    %v1252 = vmul.f32 %v1248, 0.5
    %v1253 = vmul.f32 %v1249, 0.5
    %v1254 = vld [vmem:[%s1 + $0x110] sm:$0xff]
    %v1255 = vld [vmem:[%s1 + $0x118] sm:$0xff]
    %v1256 = vld [vmem:[%s1 + $0x120] sm:$0xff]
    %v1257 = vld [vmem:[%s1 + $0x128] sm:$0xff]
    %v1258 = vlaneseq
    %v1259 = vshrl.u32 %v1258, 7
    %v1260 = vsub.s32 3, %v1259
    %v1261 = vrot.slane %v107, %v1260
    %v1263 = vsel %vm232, %v1250, 0
    %v1266 = vsel %vm232, %v1251, 0
    %v1269 = vsel %vm232, %v1252, 0
    %v1272 = vsel %vm232, %v1253, 0
    %1274 = vmatprep.subr.mxu0 0.0
    %1275 = vmatpush1.msra.mxu0 0.0
    %1276 = vmatprep.subr.mxu0 0.0
    %1277 = vmatpush1.msra.mxu0 0.0
    %1278 = vmatprep.subr.mxu0 0.0
    %1279 = vmatpush1.msra.mxu0 0.0
    %1280 = vmatprep.subr.mxu0 0.0
    %1281 = vmatpush1.msra.mxu0 0.0
    %1282 = vmatprep.subr.mxu0 0.0
    %1283 = vmatpush1.msra.mxu0 0.0
    %1284 = vmatprep.subr.mxu0 0.0
    %1285 = vmatpush1.msra.mxu0 0.0
    %1286 = vmatprep.subr.mxu0 0.0
    %1287 = vmatpush1.msra.mxu0 0.0
    %1288 = vmatprep.subr.mxu0 0.0
    %1289 = vmatpush1.msra.mxu0 0.0
    %1290 = vmatprep.subr.mxu0 0.0
    %1291 = vmatpush1.msra.mxu0 0.0
    %1292 = vmatprep.subr.mxu0 0.0
    %1293 = vmatpush1.msra.mxu0 0.0
    %1294 = vmatprep.subr.mxu0 0.0
    %1295 = vmatpush1.msra.mxu0 0.0
    %1296 = vmatprep.subr.mxu0 0.0
    %1297 = vmatpush1.msra.mxu0 0.0
    %1298 = vmatprep.subr.mxu0 0.0
    %1299 = vmatpush1.msra.mxu0 %v1257
    %1300 = vmatprep.subr.mxu0 0.0
    %1301 = vmatpush1.msra.mxu0 %v1256
    %1302 = vmatprep.subr.mxu0 0.0
    %1303 = vmatpush1.msra.mxu0 %v1255
    %1304 = vmatprep.subr.mxu0 0.0
    %1305 = vmatpush1.msra.mxu0 %v1254
    %1306 = vmatprep.subr.mxu0 0.0
    %1307 = vmatpush2.msra.mxu0 0.0
    %1308 = vmatprep.subr.mxu0 0.0
    %1309 = vmatpush2.msra.mxu0 0.0
    %1310 = vmatprep.subr.mxu0 0.0
    %1311 = vmatpush2.msra.mxu0 0.0
    %1312 = vmatprep.subr.mxu0 0.0
    %1313 = vmatpush2.msra.mxu0 0.0
    %1314 = vmatprep.subr.mxu0 0.0
    %1315 = vmatpush2.msra.mxu0 0.0
    %1316 = vmatprep.subr.mxu0 0.0
    %1317 = vmatpush2.msra.mxu0 0.0
    %1318 = vmatprep.subr.mxu0 0.0
    %1319 = vmatpush2.msra.mxu0 0.0
    %1320 = vmatprep.subr.mxu0 0.0
    %1321 = vmatpush2.msra.mxu0 0.0
    %1322 = vmatprep.subr.mxu0 0.0
    %1323 = vmatpush2.msra.mxu0 0.0
    %1324 = vmatprep.subr.mxu0 0.0
    %1325 = vmatpush2.msra.mxu0 0.0
    %1326 = vmatprep.subr.mxu0 0.0
    %1327 = vmatpush2.msra.mxu0 0.0
    %1328 = vmatprep.subr.mxu0 0.0
    %1329 = vmatpush2.msra.mxu0 0.0
    %1330 = vmatprep.subr.mxu0 0.0
    %1331 = vmatpush2.msra.mxu0 0.0
    %1332 = vmatprep.subr.mxu0 0.0
    %1333 = vmatpush2.msra.mxu0 0.0
    %1334 = vmatprep.subr.mxu0 0.0
    %1335 = vmatpush2.msra.mxu0 0.0
    %1336 = vmatprep.subr.mxu0 0.0
    %1337 = vmatpush2.msra.mxu0 0.0
    %1338 = vmatprep.mubr.f32.mxu0 0.0
    %1339 = vmatmul.mubr.f32.gmra.mxu0 %v1263
    %v1340 = vpop.f32.mrf.mxu0
    %v1341 = vadd.f32 %v1261, %v1340
    %v1342 = vpop.f32.mrf.mxu0
    %1343 = vmatprep.mubr.f32.mxu0 0.0
    %1344 = vmatmul.mubr.f32.gmra.mxu0 %v1266
    %v1345 = vpop.f32.mrf.mxu0
    %v1346 = vadd.f32 %v1261, %v1345
    %v1347 = vpop.f32.mrf.mxu0
    %1348 = vmatprep.mubr.f32.mxu0 0.0
    %1349 = vmatmul.mubr.f32.gmra.mxu0 %v1269
    %v1350 = vpop.f32.mrf.mxu0
    %v1351 = vadd.f32 %v1261, %v1350
    %v1352 = vpop.f32.mrf.mxu0
    %1353 = vmatprep.mubr.f32.mxu0 0.0
    %1354 = vmatmul.mubr.f32.gmra.mxu0 %v1272
    %v1355 = vpop.f32.mrf.mxu0
    %v1356 = vadd.f32 %v1261, %v1355
    %v1357 = vpop.f32.mrf.mxu0
    %1358 = vdwg.mxu0
    %v1359 = vsel %vm232, %v1341, 0.0
    %1360 = vadd.xlane.f32.xlu0 %v1359
    %v1361 = vpop.xlane.xlu0 %1360
    %v1362 = vsel %vm232, %v1346, 0.0
    %1363 = vadd.xlane.f32.xlu0 %v1362
    %v1364 = vpop.xlane.xlu0 %1363
    %v1365 = vsel %vm232, %v1351, 0.0
    %1366 = vadd.xlane.f32.xlu0 %v1365
    %v1367 = vpop.xlane.xlu0 %1366
    %v1368 = vsel %vm232, %v1356, 0.0
    %1369 = vadd.xlane.f32.xlu0 %v1368
    %v1370 = vpop.xlane.xlu0 %1369
    %v1371 = vmul.f32 %v1361, %v723
    %v1372 = vmul.f32 %v1364, %v723
    %v1373 = vmul.f32 %v1367, %v723
    %v1374 = vmul.f32 %v1370, %v723
    %v1375 = vsub.f32 %v1341, %v1371
    %v1376 = vsub.f32 %v1346, %v1372
    %v1377 = vsub.f32 %v1351, %v1373
    %v1378 = vsub.f32 %v1356, %v1374
    %v1379 = vmul.f32 %v1375, %v1375
    %v1380 = vmul.f32 %v1376, %v1376
    %v1381 = vmul.f32 %v1377, %v1377
    %v1382 = vmul.f32 %v1378, %v1378
    %v1383 = vsel %vm232, %v1379, 0.0
    %1384 = vadd.xlane.f32.xlu0 %v1383
    %v1385 = vpop.xlane.xlu0 %1384
    %v1386 = vsel %vm232, %v1380, 0.0
    %1387 = vadd.xlane.f32.xlu0 %v1386
    %v1388 = vpop.xlane.xlu0 %1387
    %v1389 = vsel %vm232, %v1381, 0.0
    %1390 = vadd.xlane.f32.xlu0 %v1389
    %v1391 = vpop.xlane.xlu0 %1390
    %v1392 = vsel %vm232, %v1382, 0.0
    %1393 = vadd.xlane.f32.xlu0 %v1392
    %v1394 = vpop.xlane.xlu0 %1393
    %v1395 = vmul.f32 %v1385, %v723
    %v1396 = vmul.f32 %v1388, %v723
    %v1397 = vmul.f32 %v1391, %v723
    %v1398 = vmul.f32 %v1394, %v723
    %v1399 = vadd.f32 %v1395, 1e-05
    %v1400 = vadd.f32 %v1396, 1e-05
    %v1401 = vadd.f32 %v1397, 1e-05
    %v1402 = vadd.f32 %v1398, 1e-05
    %v1403 = vrsqrt.pop %v1399
    %v1404 = vrsqrt.pop %v1400
    %v1405 = vrsqrt.pop %v1401
    %v1406 = vrsqrt.pop %v1402
    %v1407 = vmul.f32 %v1375, %v1403
    %v1408 = vmul.f32 %v1376, %v1404
    %v1409 = vmul.f32 %v1377, %v1405
    %v1410 = vmul.f32 %v1378, %v1406
    %v1411 = vlaneseq
    %v1412 = vshrl.u32 %v1411, 7
    %v1413 = vsub.s32 4, %v1412
    %v1414 = vrot.slane %v107, %v1413
    %v1415 = vmul.f32 %v1407, %v1414
    %v1416 = vmul.f32 %v1408, %v1414
    %v1417 = vmul.f32 %v1409, %v1414
    %v1418 = vmul.f32 %v1410, %v1414
    %v1419 = vlaneseq
    %v1420 = vshrl.u32 %v1419, 7
    %v1421 = vsub.s32 5, %v1420
    %v1422 = vrot.slane %v107, %v1421
    %v1423 = vadd.f32 %v1415, %v1422
    %v1424 = vadd.f32 %v1416, %v1422
    %v1425 = vadd.f32 %v1417, %v1422
    %v1426 = vadd.f32 %v1418, %v1422
    %v1427 = vmax.f32 %v1423, 0.0
    %v1428 = vmax.f32 %v1424, 0.0
    %v1429 = vmax.f32 %v1425, 0.0
    %v1430 = vmax.f32 %v1426, 0.0
    %v1431 = vmul.f32 %v856, 2.0
    %v1432 = vmul.f32 %v857, 2.0
    %v1433 = vmul.f32 %v858, 2.0
    %v1434 = vmul.f32 %v859, 2.0
    %v1435 = vadd.f32 %v1427, %v1431
    %v1436 = vadd.f32 %v1428, %v1432
    %v1437 = vadd.f32 %v1429, %v1433
    %v1438 = vadd.f32 %v1430, %v1434
    %v1439 = vsel %vm232, %v1435, 0.0
    %1440 = vadd.xlane.f32.xlu0 %v1439
    %v1441 = vpop.xlane.xlu0 %1440
    %v1442 = vsel %vm232, %v1436, 0.0
    %1443 = vadd.xlane.f32.xlu0 %v1442
    %v1444 = vpop.xlane.xlu0 %1443
    %v1445 = vsel %vm232, %v1437, 0.0
    %1446 = vadd.xlane.f32.xlu0 %v1445
    %v1447 = vpop.xlane.xlu0 %1446
    %v1448 = vsel %vm232, %v1438, 0.0
    %1449 = vadd.xlane.f32.xlu0 %v1448
    %v1450 = vpop.xlane.xlu0 %1449
    %v1451 = vmul.f32 %v1441, %v723
    %v1452 = vmul.f32 %v1444, %v723
    %v1453 = vmul.f32 %v1447, %v723
    %v1454 = vmul.f32 %v1450, %v723
    %v1455 = vsub.f32 %v1435, %v1451
    %v1456 = vsub.f32 %v1436, %v1452
    %v1457 = vsub.f32 %v1437, %v1453
    %v1458 = vsub.f32 %v1438, %v1454
    %v1459 = vmul.f32 %v1455, %v1455
    %v1460 = vmul.f32 %v1456, %v1456
    %v1461 = vmul.f32 %v1457, %v1457
    %v1462 = vmul.f32 %v1458, %v1458
    %v1463 = vsel %vm232, %v1459, 0.0
    %1464 = vadd.xlane.f32.xlu0 %v1463
    %v1465 = vpop.xlane.xlu0 %1464
    %v1466 = vsel %vm232, %v1460, 0.0
    %1467 = vadd.xlane.f32.xlu0 %v1466
    %v1468 = vpop.xlane.xlu0 %1467
    %v1469 = vsel %vm232, %v1461, 0.0
    %1470 = vadd.xlane.f32.xlu0 %v1469
    %v1471 = vpop.xlane.xlu0 %1470
    %v1472 = vsel %vm232, %v1462, 0.0
    %1473 = vadd.xlane.f32.xlu0 %v1472
    %v1474 = vpop.xlane.xlu0 %1473
    %v1475 = vmul.f32 %v1465, %v723
    %v1476 = vmul.f32 %v1468, %v723
    %v1477 = vmul.f32 %v1471, %v723
    %v1478 = vmul.f32 %v1474, %v723
    %v1479 = vadd.f32 %v1475, 1e-05
    %v1480 = vadd.f32 %v1476, 1e-05
    %v1481 = vadd.f32 %v1477, 1e-05
    %v1482 = vadd.f32 %v1478, 1e-05
    %v1483 = vrsqrt.pop %v1479
    %v1484 = vrsqrt.pop %v1480
    %v1485 = vrsqrt.pop %v1481
    %v1486 = vrsqrt.pop %v1482
    %v1487 = vmul.f32 %v1455, %v1483
    %v1488 = vmul.f32 %v1456, %v1484
    %v1489 = vmul.f32 %v1457, %v1485
    %v1490 = vmul.f32 %v1458, %v1486
    %v1491 = vlaneseq
    %v1492 = vshrl.u32 %v1491, 7
    %v1493 = vsub.s32 6, %v1492
    %v1494 = vrot.slane %v107, %v1493
    %v1495 = vmul.f32 %v1487, %v1494
    %v1496 = vmul.f32 %v1488, %v1494
    %v1497 = vmul.f32 %v1489, %v1494
    %v1498 = vmul.f32 %v1490, %v1494
    %v1499 = vlaneseq
    %v1500 = vshrl.u32 %v1499, 7
    %v1501 = vsub.s32 7, %v1500
    %v1502 = vrot.slane %v107, %v1501
    %v1503 = vadd.f32 %v1495, %v1502
    %v1504 = vadd.f32 %v1496, %v1502
    %v1505 = vadd.f32 %v1497, %v1502
    %v1506 = vadd.f32 %v1498, %v1502
    %v1507 = vld [vmem:[%s1 + $0x130] sm:$0xff]
    %v1508 = vld [vmem:[%s1 + $0x138] sm:$0xff]
    %v1509 = vld [vmem:[%s1 + $0x140] sm:$0xff]
    %v1510 = vld [vmem:[%s1 + $0x148] sm:$0xff]
    %v1512 = vsel %vm232, %v1503, 0
    %v1515 = vsel %vm232, %v1504, 0
    %v1518 = vsel %vm232, %v1505, 0
    %v1521 = vsel %vm232, %v1506, 0
    %1523 = vmatprep.subr.mxu0 0.0
    %1524 = vmatpush1.msra.mxu0 0.0
    %1525 = vmatprep.subr.mxu0 0.0
    %1526 = vmatpush1.msra.mxu0 0.0
    %1527 = vmatprep.subr.mxu0 0.0
    %1528 = vmatpush1.msra.mxu0 0.0
    %1529 = vmatprep.subr.mxu0 0.0
    %1530 = vmatpush1.msra.mxu0 0.0
    %1531 = vmatprep.subr.mxu0 0.0
    %1532 = vmatpush1.msra.mxu0 0.0
    %1533 = vmatprep.subr.mxu0 0.0
    %1534 = vmatpush1.msra.mxu0 0.0
    %1535 = vmatprep.subr.mxu0 0.0
    %1536 = vmatpush1.msra.mxu0 0.0
    %1537 = vmatprep.subr.mxu0 0.0
    %1538 = vmatpush1.msra.mxu0 0.0
    %1539 = vmatprep.subr.mxu0 0.0
    %1540 = vmatpush1.msra.mxu0 0.0
    %1541 = vmatprep.subr.mxu0 0.0
    %1542 = vmatpush1.msra.mxu0 0.0
    %1543 = vmatprep.subr.mxu0 0.0
    %1544 = vmatpush1.msra.mxu0 0.0
    %1545 = vmatprep.subr.mxu0 0.0
    %1546 = vmatpush1.msra.mxu0 0.0
    %1547 = vmatprep.subr.mxu0 0.0
    %1548 = vmatpush1.msra.mxu0 %v1510
    %1549 = vmatprep.subr.mxu0 0.0
    %1550 = vmatpush1.msra.mxu0 %v1509
    %1551 = vmatprep.subr.mxu0 0.0
    %1552 = vmatpush1.msra.mxu0 %v1508
    %1553 = vmatprep.subr.mxu0 0.0
    %1554 = vmatpush1.msra.mxu0 %v1507
    %1555 = vmatprep.subr.mxu0 0.0
    %1556 = vmatpush2.msra.mxu0 0.0
    %1557 = vmatprep.subr.mxu0 0.0
    %1558 = vmatpush2.msra.mxu0 0.0
    %1559 = vmatprep.subr.mxu0 0.0
    %1560 = vmatpush2.msra.mxu0 0.0
    %1561 = vmatprep.subr.mxu0 0.0
    %1562 = vmatpush2.msra.mxu0 0.0
    %1563 = vmatprep.subr.mxu0 0.0
    %1564 = vmatpush2.msra.mxu0 0.0
    %1565 = vmatprep.subr.mxu0 0.0
    %1566 = vmatpush2.msra.mxu0 0.0
    %1567 = vmatprep.subr.mxu0 0.0
    %1568 = vmatpush2.msra.mxu0 0.0
    %1569 = vmatprep.subr.mxu0 0.0
    %1570 = vmatpush2.msra.mxu0 0.0
    %1571 = vmatprep.subr.mxu0 0.0
    %1572 = vmatpush2.msra.mxu0 0.0
    %1573 = vmatprep.subr.mxu0 0.0
    %1574 = vmatpush2.msra.mxu0 0.0
    %1575 = vmatprep.subr.mxu0 0.0
    %1576 = vmatpush2.msra.mxu0 0.0
    %1577 = vmatprep.subr.mxu0 0.0
    %1578 = vmatpush2.msra.mxu0 0.0
    %1579 = vmatprep.subr.mxu0 0.0
    %1580 = vmatpush2.msra.mxu0 0.0
    %1581 = vmatprep.subr.mxu0 0.0
    %1582 = vmatpush2.msra.mxu0 0.0
    %1583 = vmatprep.subr.mxu0 0.0
    %1584 = vmatpush2.msra.mxu0 0.0
    %1585 = vmatprep.subr.mxu0 0.0
    %1586 = vmatpush2.msra.mxu0 0.0
    %1587 = vmatprep.mubr.f32.mxu0 0.0
    %1588 = vmatmul.mubr.f32.gmra.mxu0 %v1512
    %v1589 = vpop.f32.mrf.mxu0
    %v1590 = vadd.f32 0.0, %v1589
    %v1591 = vpop.f32.mrf.mxu0
    %1592 = vmatprep.mubr.f32.mxu0 0.0
    %1593 = vmatmul.mubr.f32.gmra.mxu0 %v1515
    %v1594 = vpop.f32.mrf.mxu0
    %v1595 = vadd.f32 0.0, %v1594
    %v1596 = vpop.f32.mrf.mxu0
    %1597 = vmatprep.mubr.f32.mxu0 0.0
    %1598 = vmatmul.mubr.f32.gmra.mxu0 %v1518
    %v1599 = vpop.f32.mrf.mxu0
    %v1600 = vadd.f32 0.0, %v1599
    %v1601 = vpop.f32.mrf.mxu0
    %1602 = vmatprep.mubr.f32.mxu0 0.0
    %1603 = vmatmul.mubr.f32.gmra.mxu0 %v1521
    %v1604 = vpop.f32.mrf.mxu0
    %v1605 = vadd.f32 0.0, %v1604
    %v1606 = vpop.f32.mrf.mxu0
    %1607 = vdwg.mxu0
    %1608 = vmatprep.subr.mxu0 0.0
    %1609 = vmatpush1.msra.mxu0 0.0
    %1610 = vmatprep.subr.mxu0 0.0
    %1611 = vmatpush1.msra.mxu0 0.0
    %1612 = vmatprep.subr.mxu0 0.0
    %1613 = vmatpush1.msra.mxu0 0.0
    %1614 = vmatprep.subr.mxu0 0.0
    %1615 = vmatpush1.msra.mxu0 0.0
    %1616 = vmatprep.subr.mxu0 0.0
    %1617 = vmatpush1.msra.mxu0 0.0
    %1618 = vmatprep.subr.mxu0 0.0
    %1619 = vmatpush1.msra.mxu0 0.0
    %1620 = vmatprep.subr.mxu0 0.0
    %1621 = vmatpush1.msra.mxu0 0.0
    %1622 = vmatprep.subr.mxu0 0.0
    %1623 = vmatpush1.msra.mxu0 0.0
    %1624 = vmatprep.subr.mxu0 0.0
    %1625 = vmatpush1.msra.mxu0 0.0
    %1626 = vmatprep.subr.mxu0 0.0
    %1627 = vmatpush1.msra.mxu0 0.0
    %1628 = vmatprep.subr.mxu0 0.0
    %1629 = vmatpush1.msra.mxu0 0.0
    %1630 = vmatprep.subr.mxu0 0.0
    %1631 = vmatpush1.msra.mxu0 0.0
    %1632 = vmatprep.subr.mxu0 0.0
    %1633 = vmatpush1.msra.mxu0 %v863
    %1634 = vmatprep.subr.mxu0 0.0
    %1635 = vmatpush1.msra.mxu0 %v862
    %1636 = vmatprep.subr.mxu0 0.0
    %1637 = vmatpush1.msra.mxu0 %v861
    %1638 = vmatprep.subr.mxu0 0.0
    %1639 = vmatpush1.msra.mxu0 %v860
    %1640 = vmatprep.subr.mxu0 0.0
    %1641 = vmatpush2.msra.mxu0 0.0
    %1642 = vmatprep.subr.mxu0 0.0
    %1643 = vmatpush2.msra.mxu0 0.0
    %1644 = vmatprep.subr.mxu0 0.0
    %1645 = vmatpush2.msra.mxu0 0.0
    %1646 = vmatprep.subr.mxu0 0.0
    %1647 = vmatpush2.msra.mxu0 0.0
    %1648 = vmatprep.subr.mxu0 0.0
    %1649 = vmatpush2.msra.mxu0 0.0
    %1650 = vmatprep.subr.mxu0 0.0
    %1651 = vmatpush2.msra.mxu0 0.0
    %1652 = vmatprep.subr.mxu0 0.0
    %1653 = vmatpush2.msra.mxu0 0.0
    %1654 = vmatprep.subr.mxu0 0.0
    %1655 = vmatpush2.msra.mxu0 0.0
    %1656 = vmatprep.subr.mxu0 0.0
    %1657 = vmatpush2.msra.mxu0 0.0
    %1658 = vmatprep.subr.mxu0 0.0
    %1659 = vmatpush2.msra.mxu0 0.0
    %1660 = vmatprep.subr.mxu0 0.0
    %1661 = vmatpush2.msra.mxu0 0.0
    %1662 = vmatprep.subr.mxu0 0.0
    %1663 = vmatpush2.msra.mxu0 0.0
    %1664 = vmatprep.subr.mxu0 0.0
    %1665 = vmatpush2.msra.mxu0 0.0
    %1666 = vmatprep.subr.mxu0 0.0
    %1667 = vmatpush2.msra.mxu0 0.0
    %1668 = vmatprep.subr.mxu0 0.0
    %1669 = vmatpush2.msra.mxu0 0.0
    %1670 = vmatprep.subr.mxu0 0.0
    %1671 = vmatpush2.msra.mxu0 0.0
    %1672 = vmatprep.mubr.f32.mxu0 0.0
    %1673 = vmatmul.mubr.f32.gmra.mxu0 %v883
    %v1674 = vpop.f32.mrf.mxu0
    %v1675 = vadd.f32 %v1590, %v1674
    %v1676 = vpop.f32.mrf.mxu0
    %1677 = vmatprep.mubr.f32.mxu0 0.0
    %1678 = vmatmul.mubr.f32.gmra.mxu0 %v886
    %v1679 = vpop.f32.mrf.mxu0
    %v1680 = vadd.f32 %v1595, %v1679
    %v1681 = vpop.f32.mrf.mxu0
    %1682 = vmatprep.mubr.f32.mxu0 0.0
    %1683 = vmatmul.mubr.f32.gmra.mxu0 %v889
    %v1684 = vpop.f32.mrf.mxu0
    %v1685 = vadd.f32 %v1600, %v1684
    %v1686 = vpop.f32.mrf.mxu0
    %1687 = vmatprep.mubr.f32.mxu0 0.0
    %1688 = vmatmul.mubr.f32.gmra.mxu0 %v892
    %v1689 = vpop.f32.mrf.mxu0
    %v1690 = vadd.f32 %v1605, %v1689
    %v1691 = vpop.f32.mrf.mxu0
    %1692 = vdwg.mxu0
    %s1693 = sld [smem:[#allocation2 + $0x3]]
    %v1694 = vstv %s1693
    %v1695 = vmul.f32 %v1199, %v1694
    %v1696 = vmul.f32 %v1201, %v1694
    %v1697 = vmul.f32 %v1203, %v1694
    %v1698 = vmul.f32 %v1205, %v1694
    %v1699 = vadd.f32 %v870, %v1695
    %v1700 = vadd.f32 %v871, %v1696
    %v1701 = vadd.f32 %v872, %v1697
    %v1702 = vadd.f32 %v873, %v1698
    %v1703 = vlaneseq
    %v1704 = vshrl.u32 %v1703, 7
    %v1705 = vsub.s32 0, %v1704
    %v1706 = vrot.slane %v108, %v1705
    %v1707 = vadd.f32 %v1675, %v1706
    %v1708 = vadd.f32 %v1680, %v1706
    %v1709 = vadd.f32 %v1685, %v1706
    %v1710 = vadd.f32 %v1690, %v1706
    %v1711 = vmax.f32 %v1707, 0.0
    %v1712 = vmax.f32 %v1708, 0.0
    %v1713 = vmax.f32 %v1709, 0.0
    %v1714 = vmax.f32 %v1710, 0.0
    %v1715 = vadd.f32 %v1503, %v1711
    %v1716 = vadd.f32 %v1504, %v1712
    %v1717 = vadd.f32 %v1505, %v1713
    %v1718 = vadd.f32 %v1506, %v1714
    %v1719 = vmul.f32 %v1715, 0.5
    %v1720 = vmul.f32 %v1716, 0.5
    %v1721 = vmul.f32 %v1717, 0.5
    %v1722 = vmul.f32 %v1718, 0.5
    %v1723 = vld [vmem:[%s1 + $0x150] sm:$0xff]
    %v1724 = vld [vmem:[%s1 + $0x158] sm:$0xff]
    %v1725 = vld [vmem:[%s1 + $0x160] sm:$0xff]
    %v1726 = vld [vmem:[%s1 + $0x168] sm:$0xff]
    %v1727 = vlaneseq
    %v1728 = vshrl.u32 %v1727, 7
    %v1729 = vsub.s32 1, %v1728
    %v1730 = vrot.slane %v108, %v1729
    %v1732 = vsel %vm232, %v1719, 0
    %v1735 = vsel %vm232, %v1720, 0
    %v1738 = vsel %vm232, %v1721, 0
    %v1741 = vsel %vm232, %v1722, 0
    %1743 = vmatprep.subr.mxu0 0.0
    %1744 = vmatpush1.msra.mxu0 0.0
    %1745 = vmatprep.subr.mxu0 0.0
    %1746 = vmatpush1.msra.mxu0 0.0
    %1747 = vmatprep.subr.mxu0 0.0
    %1748 = vmatpush1.msra.mxu0 0.0
    %1749 = vmatprep.subr.mxu0 0.0
    %1750 = vmatpush1.msra.mxu0 0.0
    %1751 = vmatprep.subr.mxu0 0.0
    %1752 = vmatpush1.msra.mxu0 0.0
    %1753 = vmatprep.subr.mxu0 0.0
    %1754 = vmatpush1.msra.mxu0 0.0
    %1755 = vmatprep.subr.mxu0 0.0
    %1756 = vmatpush1.msra.mxu0 0.0
    %1757 = vmatprep.subr.mxu0 0.0
    %1758 = vmatpush1.msra.mxu0 0.0
    %1759 = vmatprep.subr.mxu0 0.0
    %1760 = vmatpush1.msra.mxu0 0.0
    %1761 = vmatprep.subr.mxu0 0.0
    %1762 = vmatpush1.msra.mxu0 0.0
    %1763 = vmatprep.subr.mxu0 0.0
    %1764 = vmatpush1.msra.mxu0 0.0
    %1765 = vmatprep.subr.mxu0 0.0
    %1766 = vmatpush1.msra.mxu0 0.0
    %1767 = vmatprep.subr.mxu0 0.0
    %1768 = vmatpush1.msra.mxu0 %v1726
    %1769 = vmatprep.subr.mxu0 0.0
    %1770 = vmatpush1.msra.mxu0 %v1725
    %1771 = vmatprep.subr.mxu0 0.0
    %1772 = vmatpush1.msra.mxu0 %v1724
    %1773 = vmatprep.subr.mxu0 0.0
    %1774 = vmatpush1.msra.mxu0 %v1723
    %1775 = vmatprep.subr.mxu0 0.0
    %1776 = vmatpush2.msra.mxu0 0.0
    %1777 = vmatprep.subr.mxu0 0.0
    %1778 = vmatpush2.msra.mxu0 0.0
    %1779 = vmatprep.subr.mxu0 0.0
    %1780 = vmatpush2.msra.mxu0 0.0
    %1781 = vmatprep.subr.mxu0 0.0
    %1782 = vmatpush2.msra.mxu0 0.0
    %1783 = vmatprep.subr.mxu0 0.0
    %1784 = vmatpush2.msra.mxu0 0.0
    %1785 = vmatprep.subr.mxu0 0.0
    %1786 = vmatpush2.msra.mxu0 0.0
    %1787 = vmatprep.subr.mxu0 0.0
    %1788 = vmatpush2.msra.mxu0 0.0
    %1789 = vmatprep.subr.mxu0 0.0
    %1790 = vmatpush2.msra.mxu0 0.0
    %1791 = vmatprep.subr.mxu0 0.0
    %1792 = vmatpush2.msra.mxu0 0.0
    %1793 = vmatprep.subr.mxu0 0.0
    %1794 = vmatpush2.msra.mxu0 0.0
    %1795 = vmatprep.subr.mxu0 0.0
    %1796 = vmatpush2.msra.mxu0 0.0
    %1797 = vmatprep.subr.mxu0 0.0
    %1798 = vmatpush2.msra.mxu0 0.0
    %1799 = vmatprep.subr.mxu0 0.0
    %1800 = vmatpush2.msra.mxu0 0.0
    %1801 = vmatprep.subr.mxu0 0.0
    %1802 = vmatpush2.msra.mxu0 0.0
    %1803 = vmatprep.subr.mxu0 0.0
    %1804 = vmatpush2.msra.mxu0 0.0
    %1805 = vmatprep.subr.mxu0 0.0
    %1806 = vmatpush2.msra.mxu0 0.0
    %1807 = vmatprep.mubr.f32.mxu0 0.0
    %1808 = vmatmul.mubr.f32.gmra.mxu0 %v1732
    %v1809 = vpop.f32.mrf.mxu0
    %v1810 = vadd.f32 %v1730, %v1809
    %v1811 = vpop.f32.mrf.mxu0
    %1812 = vmatprep.mubr.f32.mxu0 0.0
    %1813 = vmatmul.mubr.f32.gmra.mxu0 %v1735
    %v1814 = vpop.f32.mrf.mxu0
    %v1815 = vadd.f32 %v1730, %v1814
    %v1816 = vpop.f32.mrf.mxu0
    %1817 = vmatprep.mubr.f32.mxu0 0.0
    %1818 = vmatmul.mubr.f32.gmra.mxu0 %v1738
    %v1819 = vpop.f32.mrf.mxu0
    %v1820 = vadd.f32 %v1730, %v1819
    %v1821 = vpop.f32.mrf.mxu0
    %1822 = vmatprep.mubr.f32.mxu0 0.0
    %1823 = vmatmul.mubr.f32.gmra.mxu0 %v1741
    %v1824 = vpop.f32.mrf.mxu0
    %v1825 = vadd.f32 %v1730, %v1824
    %v1826 = vpop.f32.mrf.mxu0
    %1827 = vdwg.mxu0
    %v1828 = vmax.f32 %v1810, 0.0
    %v1829 = vmax.f32 %v1815, 0.0
    %v1830 = vmax.f32 %v1820, 0.0
    %v1831 = vmax.f32 %v1825, 0.0
    %v1832 = vld [vmem:[%s1 + $0x170] sm:$0xff]
    %v1833 = vld [vmem:[%s1 + $0x178] sm:$0xff]
    %v1834 = vlaneseq
    %v1835 = vshrl.u32 %v1834, 7
    %v1836 = vsub.s32 2, %v1835
    %v1837 = vrot.slane %v108, %v1836
    %v1839 = vsel %vm34, %v1828, 0
    %v1842 = vsel %vm34, %v1829, 0
    %v1845 = vsel %vm34, %v1830, 0
    %v1848 = vsel %vm34, %v1831, 0
    %1850 = vmatprep.subr.mxu0 0.0
    %1851 = vmatpush1.msra.mxu0 0.0
    %1852 = vmatprep.subr.mxu0 0.0
    %1853 = vmatpush1.msra.mxu0 0.0
    %1854 = vmatprep.subr.mxu0 0.0
    %1855 = vmatpush1.msra.mxu0 0.0
    %1856 = vmatprep.subr.mxu0 0.0
    %1857 = vmatpush1.msra.mxu0 0.0
    %1858 = vmatprep.subr.mxu0 0.0
    %1859 = vmatpush1.msra.mxu0 0.0
    %1860 = vmatprep.subr.mxu0 0.0
    %1861 = vmatpush1.msra.mxu0 0.0
    %1862 = vmatprep.subr.mxu0 0.0
    %1863 = vmatpush1.msra.mxu0 0.0
    %1864 = vmatprep.subr.mxu0 0.0
    %1865 = vmatpush1.msra.mxu0 0.0
    %1866 = vmatprep.subr.mxu0 0.0
    %1867 = vmatpush1.msra.mxu0 0.0
    %1868 = vmatprep.subr.mxu0 0.0
    %1869 = vmatpush1.msra.mxu0 0.0
    %1870 = vmatprep.subr.mxu0 0.0
    %1871 = vmatpush1.msra.mxu0 0.0
    %1872 = vmatprep.subr.mxu0 0.0
    %1873 = vmatpush1.msra.mxu0 0.0
    %1874 = vmatprep.subr.mxu0 0.0
    %1875 = vmatpush1.msra.mxu0 0.0
    %1876 = vmatprep.subr.mxu0 0.0
    %1877 = vmatpush1.msra.mxu0 0.0
    %1878 = vmatprep.subr.mxu0 0.0
    %1879 = vmatpush1.msra.mxu0 %v1833
    %1880 = vmatprep.subr.mxu0 0.0
    %1881 = vmatpush1.msra.mxu0 %v1832
    %1882 = vmatprep.subr.mxu0 0.0
    %1883 = vmatpush2.msra.mxu0 0.0
    %1884 = vmatprep.subr.mxu0 0.0
    %1885 = vmatpush2.msra.mxu0 0.0
    %1886 = vmatprep.subr.mxu0 0.0
    %1887 = vmatpush2.msra.mxu0 0.0
    %1888 = vmatprep.subr.mxu0 0.0
    %1889 = vmatpush2.msra.mxu0 0.0
    %1890 = vmatprep.subr.mxu0 0.0
    %1891 = vmatpush2.msra.mxu0 0.0
    %1892 = vmatprep.subr.mxu0 0.0
    %1893 = vmatpush2.msra.mxu0 0.0
    %1894 = vmatprep.subr.mxu0 0.0
    %1895 = vmatpush2.msra.mxu0 0.0
    %1896 = vmatprep.subr.mxu0 0.0
    %1897 = vmatpush2.msra.mxu0 0.0
    %1898 = vmatprep.subr.mxu0 0.0
    %1899 = vmatpush2.msra.mxu0 0.0
    %1900 = vmatprep.subr.mxu0 0.0
    %1901 = vmatpush2.msra.mxu0 0.0
    %1902 = vmatprep.subr.mxu0 0.0
    %1903 = vmatpush2.msra.mxu0 0.0
    %1904 = vmatprep.subr.mxu0 0.0
    %1905 = vmatpush2.msra.mxu0 0.0
    %1906 = vmatprep.subr.mxu0 0.0
    %1907 = vmatpush2.msra.mxu0 0.0
    %1908 = vmatprep.subr.mxu0 0.0
    %1909 = vmatpush2.msra.mxu0 0.0
    %1910 = vmatprep.subr.mxu0 0.0
    %1911 = vmatpush2.msra.mxu0 0.0
    %1912 = vmatprep.subr.mxu0 0.0
    %1913 = vmatpush2.msra.mxu0 0.0
    %1914 = vmatprep.mubr.f32.mxu0 0.0
    %1915 = vmatmul.mubr.f32.gmra.mxu0 %v1839
    %v1916 = vpop.f32.mrf.mxu0
    %v1917 = vadd.f32 %v1837, %v1916
    %v1918 = vpop.f32.mrf.mxu0
    %1919 = vmatprep.mubr.f32.mxu0 0.0
    %1920 = vmatmul.mubr.f32.gmra.mxu0 %v1842
    %v1921 = vpop.f32.mrf.mxu0
    %v1922 = vadd.f32 %v1837, %v1921
    %v1923 = vpop.f32.mrf.mxu0
    %1924 = vmatprep.mubr.f32.mxu0 0.0
    %1925 = vmatmul.mubr.f32.gmra.mxu0 %v1845
    %v1926 = vpop.f32.mrf.mxu0
    %v1927 = vadd.f32 %v1837, %v1926
    %v1928 = vpop.f32.mrf.mxu0
    %1929 = vmatprep.mubr.f32.mxu0 0.0
    %1930 = vmatmul.mubr.f32.gmra.mxu0 %v1848
    %v1931 = vpop.f32.mrf.mxu0
    %v1932 = vadd.f32 %v1837, %v1931
    %v1933 = vpop.f32.mrf.mxu0
    %1934 = vdwg.mxu0
    %1936 = vrot.lane.b32.xlu0 %v70, 124
    %v1937 = vpop.permute.xlu0 %1936
    %v1939 = vmul.f32 %v1917, %v1937
    %v1940 = vmul.f32 %v1922, %v1937
    %1942 = vrot.lane.b32.xlu0 %v45, 124
    %v1943 = vpop.permute.xlu0 %1942
    %v1945 = vadd.f32 %v1939, %v1943
    %v1946 = vadd.f32 %v1940, %v1943
    %1948 = vrot.lane.b32.xlu0 %v105, 124
    %v1949 = vpop.permute.xlu0 %1948
    %v1951 = vmul.f32 %v1927, %v1949
    %v1952 = vmul.f32 %v1932, %v1949
    %1954 = vrot.lane.b32.xlu0 %v80, 124
    %v1955 = vpop.permute.xlu0 %1954
    %v1957 = vadd.f32 %v1951, %v1955
    %v1958 = vadd.f32 %v1952, %v1955
    %s1959 = sld [smem:[#allocation2 + $0x4]]
    %v1960 = vstv %s1959
    %v1961 = vadd.f32 %v1699, %v1960
    %v1962 = vadd.f32 %v1700, %v1960
    %v1963 = vadd.f32 %v1701, %v1960
    %v1964 = vadd.f32 %v1702, %v1960
    %v1965 = vxor.u32 %v1961, 2147483648
    %v1966 = vxor.u32 %v1962, 2147483648
    %v1967 = vxor.u32 %v1963, 2147483648
    %v1968 = vxor.u32 %v1964, 2147483648
    %v1969 = vmul.f32 %v1965, 1.442695
    %v1970 = vpow.pop %v1969
    %v1971 = vmul.f32 %v1966, 1.442695
    %v1972 = vpow.pop %v1971
    %v1973 = vmul.f32 %v1967, 1.442695
    %v1974 = vpow.pop %v1973
    %v1975 = vmul.f32 %v1968, 1.442695
    %v1976 = vpow.pop %v1975
    %v1977 = vadd.f32 %v1970, 1.0
    %v1978 = vadd.f32 %v1972, 1.0
    %v1979 = vadd.f32 %v1974, 1.0
    %v1980 = vadd.f32 %v1976, 1.0
    %v1981 = vrcp.pop %v1977
    %v1982 = vmul.f32 1.0, %v1981
    %v1983 = vrcp.pop %v1978
    %v1984 = vmul.f32 1.0, %v1983
    %v1985 = vrcp.pop %v1979
    %v1986 = vmul.f32 1.0, %v1985
    %v1987 = vrcp.pop %v1980
    %v1988 = vmul.f32 1.0, %v1987
    %vm1989 = vcmask 31744
    %v1990 = vsel %vm1989, %v1945, %v1982
    %v1991 = vsel %vm1989, %v1946, %v1984
    %v1992 = vsel %vm1989, %v1957, %v1986
    %v1993 = vsel %vm1989, %v1958, %v1988
    %vm1994 = vcmask 39936
    %v1995 = vsel %vm1994, %v1990, 0.0
    %v1996 = vsel %vm1994, %v1991, 0.0
    %v1997 = vsel %vm1994, %v1992, 0.0
    %v1998 = vsel %vm1994, %v1993, 0.0
    %1999 = vst [vmem:[%s4] sm:$0xff] %v1995
    %2000 = vst [vmem:[%s4 + $0x8] sm:$0xff] %v1996
    %2001 = vst [vmem:[%s4 + $0x10] sm:$0xff] %v1997
    %2002 = vst [vmem:[%s4 + $0x18] sm:$0xff] %v1998
    // Predicated region
    $region22: #{model_forward.1} parent=1 // pred_check
      _
    $region23: #{model_forward.1} parent=1 // pred_check_branch
      %2004 = sbr.rel (0) target = $region25
    $region24: #{model_forward.1} parent=1 // pred_region
      _
    $region25: #{model_forward.1} parent=1 // pred_fallthru
      _
    // Predicated region
    $region26: #{model_forward.1} parent=1 // pred_check
      _
    $region27: #{model_forward.1} parent=1 // pred_check_branch
      %2006 = sbr.rel (0) target = $region29
    $region28: #{model_forward.1} parent=1 // pred_region
      _
    $region29: #{model_forward.1} parent=1 // pred_fallthru
      _
    %2007 = vsyncpa [#allocation3], 1

</llo_original>
